<compile_context>
chip_gen: v7x
topology: tpu7x:2x2x1
jax: 0.10.0
libtpu: 0.0.40
codegen_flags: <defaults>
</compile_context>

<pallas_src>
import functools

import jax
import jax.numpy as jnp
from jax.experimental import pallas as pl
from jax.experimental.pallas import tpu as pltpu

_LANES = 128
_NEG_INF = -1e30


def _round_up(v, m):
    return ((v + m - 1) // m) * m


def _default_vmem_limit_bytes():
    """Generation-aware VMEM budget: ~100 MiB on 128-MiB chips (v5e/v6e),
    ~85% of capacity on 64-MiB chips (v7x).  Falls back safely if the query
    is unavailable."""
    try:
        cap = int(pltpu.get_tpu_info().vmem_capacity_bytes)
    except Exception:
        cap = 128 * 1024 * 1024
    return min(100 * 1024 * 1024, int(cap * 0.85))


_VMEM_LIMIT_BYTES = _default_vmem_limit_bytes()


# ------------------------------ fused kernel ------------------------------- #

def _gcn_net_kernel(a_ref, dis_ref, x_ref, w1_ref, b1_ref, wg_ref, asrc_ref,
                    adst_ref, bg_ref, w2_ref, b2_ref, o_ref, *,
                    num_label, n_gat):
    f32 = jnp.float32
    bf16 = jnp.bfloat16

    # ---- single adjacency copy (bf16, exact 0/1); mask derived from it ----
    a_bf = a_ref[...]                                            # (Np, Np) bf16
    mask = a_bf != 0                                             # attention mask
    dis = dis_ref[...]                                           # (Np, 1) f32, D^{-1/2}

    x = x_ref[...]                                               # (Np, Fp) f32 (pre-standardized)

    # ---- GCN1: dis * (A @ (dis * (X W1))) + b1, ReLU ----
    h = jnp.dot(x.astype(bf16), w1_ref[...], preferred_element_type=f32)
    h = dis * jnp.dot(a_bf, (dis * h).astype(bf16),
                      preferred_element_type=f32) + b1_ref[...]
    h = jnp.maximum(h, 0.0)
    # dropout (eval mode) -> identity

    # ---- GAT x n_gat (shared weights, as in the reference module), 1 head ----
    wg = wg_ref[...]                                             # (Hp, Hp) bf16
    asrc = asrc_ref[...]                                         # (1, Hp) f32
    adst = adst_ref[...]                                         # (1, Hp) f32
    bg = bg_ref[...]                                             # (1, Hp) f32

    def gat_layer(_, h):
        hw = jnp.dot(h.astype(bf16), wg, preferred_element_type=f32)   # (Np, Hp)
        # attention projections: VPU multiply + lane reduce (no 1-lane matmuls);
        # e_src computed ONCE per layer, one (Np,1)->(1,Np) transpose (XLU).
        e_src = jnp.sum(hw * asrc, axis=1, keepdims=True)        # (Np, 1)
        e_dst = jnp.sum(hw * adst, axis=1, keepdims=True)        # (Np, 1)
        e = e_dst + jnp.transpose(e_src)                         # (Np, Np)
        e = jnp.where(e > 0, e, 0.2 * e)                         # LeakyReLU(0.2)
        e = jnp.where(mask, e, _NEG_INF)
        e_max = jnp.max(e, axis=1, keepdims=True)
        p = jnp.where(mask, jnp.exp(e - e_max), 0.0)
        denom = jnp.sum(p, axis=1, keepdims=True)
        alpha = p * pl.reciprocal(denom, approx=True)            # EUP slot
        h_new = jnp.dot(alpha.astype(bf16), hw.astype(bf16),
                        preferred_element_type=f32) + bg
        return jnp.maximum(h_new, 0.0)                           # dropout (eval) -> identity

    # Unrolled only for shallow stacks; rolled loop bounds live ranges for deep ones.
    h = jax.lax.fori_loop(0, n_gat, gat_layer, h, unroll=(n_gat <= 3))

    # ---- GCN2 + fused log_softmax over the real label lanes ----
    z = jnp.dot(h.astype(bf16), w2_ref[...], preferred_element_type=f32)
    z = dis * jnp.dot(a_bf, (dis * z).astype(bf16),
                      preferred_element_type=f32) + b2_ref[...]
    lane_ids = jax.lax.broadcasted_iota(jnp.int32, z.shape, 1)
    lane_mask = lane_ids < num_label
    z = jnp.where(lane_mask, z, _NEG_INF)
    m = jnp.max(z, axis=1, keepdims=True)
    s = z - m
    lse = jnp.log(jnp.sum(jnp.where(lane_mask, jnp.exp(s), 0.0),
                          axis=1, keepdims=True))
    o_ref[...] = s - lse


# ------------------------------ JAX wrappers ------------------------------- #

def build_graph(edge_index, num_nodes):
    """Hoisted per-graph preprocessing:
       * dense A[target, source] + self-loops, lane-padded (multiple of 128)
       * stored in bf16 (exact for 0/1) -- the single adjacency copy used in-kernel
       * symmetric-normalization vector dis = D^{-1/2} (reused by both GCN layers)"""
    n_pad = _round_up(max(num_nodes, _LANES), _LANES)
    src, dst = edge_index[0], edge_index[1]
    a = jnp.zeros((n_pad, n_pad), jnp.float32).at[dst, src].set(1.0)
    a_hat = jnp.maximum(a, jnp.eye(n_pad, dtype=jnp.float32))    # self-loops (also on pads: no NaN rows)
    deg = jnp.sum(a_hat, axis=1, keepdims=True)
    dis = jnp.where(deg > 0, jax.lax.rsqrt(deg), 0.0)
    return {"a_hat": a_hat.astype(jnp.bfloat16), "dis": dis}


def init_params(key, num_feature, num_label, hiddim):
    ks = jax.random.split(key, 5)

    def glorot(k, shape):
        lim = jnp.sqrt(6.0 / (shape[0] + shape[1]))
        return jax.random.uniform(k, shape, jnp.float32, -lim, lim)

    f_pad = _round_up(num_feature, _LANES)
    h_pad = _round_up(hiddim, _LANES)
    l_pad = _round_up(num_label, _LANES)

    def pad2(w, rows, cols):
        out = jnp.zeros((rows, cols), jnp.float32)
        return out.at[:w.shape[0], :w.shape[1]].set(w)

    return {
        # matmul weights: lane-padded + bf16 (MXU operands)
        "w1": pad2(glorot(ks[0], (num_feature, hiddim)), f_pad, h_pad).astype(jnp.bfloat16),
        "wg": pad2(glorot(ks[1], (hiddim, hiddim)), h_pad, h_pad).astype(jnp.bfloat16),
        "w2": pad2(glorot(ks[2], (hiddim, num_label)), h_pad, l_pad).astype(jnp.bfloat16),
        # attention vectors & biases stay f32 (VPU path)
        "asrc": pad2(glorot(ks[3], (1, hiddim)), 1, h_pad),
        "adst": pad2(glorot(ks[4], (1, hiddim)), 1, h_pad),
        "b1": jnp.zeros((1, h_pad), jnp.float32),
        "bg": jnp.zeros((1, h_pad), jnp.float32),
        "b2": jnp.zeros((1, l_pad), jnp.float32),
    }


@functools.partial(jax.jit, static_argnames=("hidlayers", "num_label"))
def gcn_net_forward(graph, params, x, *, hidlayers, num_label):
    n_real, num_feature = x.shape
    a_hat = graph["a_hat"]
    dis = graph["dis"]
    n_pad = a_hat.shape[0]
    f_pad = params["w1"].shape[0]
    l_pad = params["b2"].shape[1]

    # Standardize hoisted OUT of the kernel (depends only on x).
    # torch.std default is unbiased (ddof=1); guard zero-std (constant) columns.
    mean = jnp.mean(x, axis=0, keepdims=True)
    std = jnp.std(x, axis=0, keepdims=True, ddof=1)
    std = jnp.where(std > 0, std, 1.0)
    x_std = (x - mean) / std

    x_p = jnp.zeros((n_pad, f_pad), jnp.float32).at[:n_real, :num_feature].set(x_std)

    out_p = pl.pallas_call(
        functools.partial(_gcn_net_kernel, num_label=num_label,
                          n_gat=hidlayers - 1),
        out_shape=jax.ShapeDtypeStruct((n_pad, l_pad), jnp.float32),
        compiler_params=pltpu.CompilerParams(vmem_limit_bytes=_VMEM_LIMIT_BYTES),
    )(a_hat, dis, x_p, params["w1"], params["b1"], params["wg"],
      params["asrc"], params["adst"], params["bg"], params["w2"], params["b2"])

    return out_p[:n_real, :num_label]


# ---------------------------------- main ----------------------------------- #

if __name__ == "__main__":
    num_nodes = 16
    num_feature = 8
    hiddim = 32
    num_label = 8
    hidlayers = 3          # -> 2 GAT layers in the loop
    # droprate irrelevant in eval mode

    key = jax.random.PRNGKey(0)
    k_x, k_p = jax.random.split(key)

    x = jax.random.normal(k_x, (num_nodes, num_feature), jnp.float32)

    # Deterministic ring graph, both directions: edge_index shape (2, 2*N)
    idx = jnp.arange(num_nodes, dtype=jnp.int32)
    src = jnp.concatenate([idx, (idx + 1) % num_nodes])
    dst = jnp.concatenate([(idx + 1) % num_nodes, idx])
    edge_index = jnp.stack([src, dst], axis=0)

    graph = build_graph(edge_index, num_nodes)          # hoisted: once per graph
    params = init_params(k_p, num_feature, num_label, hiddim)

    out = gcn_net_forward(graph, params, x, hidlayers=hidlayers, num_label=num_label)
    out = jax.block_until_ready(out)

    assert out.shape == (num_nodes, num_label)
    assert bool(jnp.all(jnp.isfinite(out)))
    # log_softmax rows should exp-sum to ~1
    row_sums = jnp.sum(jnp.exp(out), axis=1)
    assert bool(jnp.all(jnp.abs(row_sums - 1.0) < 1e-4))

    print("KERNEL_OK")
</pallas_src>

<mosaic_0001>
module attributes {stable_mosaic.version = 11 : i64} {
  func.func @_gcn_net_kernel(%arg0: memref<128x128xbf16, #tpu.memory_space<vmem>>, %arg1: memref<128x1xf32, #tpu.memory_space<vmem>>, %arg2: memref<128x128xf32, #tpu.memory_space<vmem>>, %arg3: memref<128x128xbf16, #tpu.memory_space<vmem>>, %arg4: memref<1x128xf32, #tpu.memory_space<vmem>>, %arg5: memref<128x128xbf16, #tpu.memory_space<vmem>>, %arg6: memref<1x128xf32, #tpu.memory_space<vmem>>, %arg7: memref<1x128xf32, #tpu.memory_space<vmem>>, %arg8: memref<1x128xf32, #tpu.memory_space<vmem>>, %arg9: memref<128x128xbf16, #tpu.memory_space<vmem>>, %arg10: memref<1x128xf32, #tpu.memory_space<vmem>>, %arg11: memref<128x128xf32, #tpu.memory_space<vmem>>) attributes {dimension_semantics = [], scalar_prefetch = 0 : i64, scratch_operands = 0 : i64, tpu.core_type = #tpu.core_type<tc>} {
    %c0 = arith.constant 0 : index
    %c0_0 = arith.constant 0 : index
    %0 = vector.load %arg0[%c0, %c0_0] : memref<128x128xbf16, #tpu.memory_space<vmem>>, vector<128x128xbf16>
    %cst = arith.constant 0.000000e+00 : bf16
    %1 = vector.broadcast %cst : bf16 to vector<128x128xbf16>
    %2 = arith.cmpf one, %0, %1 : vector<128x128xbf16>
    %c0_1 = arith.constant 0 : index
    %c0_2 = arith.constant 0 : index
    %3 = vector.load %arg1[%c0_1, %c0_2] : memref<128x1xf32, #tpu.memory_space<vmem>>, vector<128x1xf32>
    %c0_3 = arith.constant 0 : index
    %c0_4 = arith.constant 0 : index
    %4 = vector.load %arg2[%c0_3, %c0_4] : memref<128x128xf32, #tpu.memory_space<vmem>>, vector<128x128xf32>
    %5 = arith.truncf %4 : vector<128x128xf32> to vector<128x128xbf16>
    %c0_5 = arith.constant 0 : index
    %c0_6 = arith.constant 0 : index
    %6 = vector.load %arg3[%c0_5, %c0_6] : memref<128x128xbf16, #tpu.memory_space<vmem>>, vector<128x128xbf16>
    %cst_7 = arith.constant dense<0.000000e+00> : vector<128x128xf32>
    %7 = tpu.matmul %5, %6, %cst_7 {dimension_numbers = #tpu.dot_dimension_numbers<[1], [0], [0], [1], [0, 0, 1, 1], [], []>} : vector<128x128xbf16>, vector<128x128xbf16>, vector<128x128xf32> -> vector<128x128xf32>
    %8 = vector.broadcast %3 : vector<128x1xf32> to vector<128x128xf32>
    %9 = arith.mulf %8, %7 : vector<128x128xf32>
    %10 = arith.truncf %9 : vector<128x128xf32> to vector<128x128xbf16>
    %cst_8 = arith.constant dense<0.000000e+00> : vector<128x128xf32>
    %11 = tpu.matmul %0, %10, %cst_8 {dimension_numbers = #tpu.dot_dimension_numbers<[1], [0], [0], [1], [0, 0, 1, 1], [], []>} : vector<128x128xbf16>, vector<128x128xbf16>, vector<128x128xf32> -> vector<128x128xf32>
    %12 = vector.broadcast %3 : vector<128x1xf32> to vector<128x128xf32>
    %13 = arith.mulf %12, %11 : vector<128x128xf32>
    %c0_9 = arith.constant 0 : index
    %c0_10 = arith.constant 0 : index
    %14 = vector.load %arg4[%c0_9, %c0_10] : memref<1x128xf32, #tpu.memory_space<vmem>>, vector<1x128xf32>
    %15 = vector.broadcast %14 : vector<1x128xf32> to vector<128x128xf32>
    %16 = arith.addf %13, %15 : vector<128x128xf32>
    %cst_11 = arith.constant 0.000000e+00 : f32
    %17 = vector.broadcast %cst_11 : f32 to vector<128x128xf32>
    %18 = arith.maximumf %16, %17 : vector<128x128xf32>
    %c0_12 = arith.constant 0 : index
    %c0_13 = arith.constant 0 : index
    %19 = vector.load %arg5[%c0_12, %c0_13] : memref<128x128xbf16, #tpu.memory_space<vmem>>, vector<128x128xbf16>
    %c0_14 = arith.constant 0 : index
    %c0_15 = arith.constant 0 : index
    %20 = vector.load %arg6[%c0_14, %c0_15] : memref<1x128xf32, #tpu.memory_space<vmem>>, vector<1x128xf32>
    %c0_16 = arith.constant 0 : index
    %c0_17 = arith.constant 0 : index
    %21 = vector.load %arg7[%c0_16, %c0_17] : memref<1x128xf32, #tpu.memory_space<vmem>>, vector<1x128xf32>
    %c0_18 = arith.constant 0 : index
    %c0_19 = arith.constant 0 : index
    %22 = vector.load %arg8[%c0_18, %c0_19] : memref<1x128xf32, #tpu.memory_space<vmem>>, vector<1x128xf32>
    %c0_i32 = arith.constant 0 : i32
    %23 = arith.truncf %18 : vector<128x128xf32> to vector<128x128xbf16>
    %cst_20 = arith.constant dense<0.000000e+00> : vector<128x128xf32>
    %24 = tpu.matmul %23, %19, %cst_20 {dimension_numbers = #tpu.dot_dimension_numbers<[1], [0], [0], [1], [0, 0, 1, 1], [], []>} : vector<128x128xbf16>, vector<128x128xbf16>, vector<128x128xf32> -> vector<128x128xf32>
    %25 = vector.broadcast %20 : vector<1x128xf32> to vector<128x128xf32>
    %26 = arith.mulf %24, %25 : vector<128x128xf32>
    %cst_21 = arith.constant dense<0.000000e+00> : vector<128xf32>
    %27 = vector.multi_reduction <add>, %26, %cst_21 [1] : vector<128x128xf32> to vector<128xf32>
    %28 = vector.shape_cast %27 : vector<128xf32> to vector<128x1xf32>
    %29 = vector.broadcast %21 : vector<1x128xf32> to vector<128x128xf32>
    %30 = arith.mulf %24, %29 : vector<128x128xf32>
    %cst_22 = arith.constant dense<0.000000e+00> : vector<128xf32>
    %31 = vector.multi_reduction <add>, %30, %cst_22 [1] : vector<128x128xf32> to vector<128xf32>
    %32 = vector.shape_cast %31 : vector<128xf32> to vector<128x1xf32>
    %33 = tpu.transpose %28, [1, 0] : vector<128x1xf32> -> vector<1x128xf32>
    %34 = vector.broadcast %32 : vector<128x1xf32> to vector<128x128xf32>
    %35 = vector.broadcast %33 : vector<1x128xf32> to vector<128x128xf32>
    %36 = arith.addf %34, %35 : vector<128x128xf32>
    %cst_23 = arith.constant 0.000000e+00 : f32
    %37 = vector.broadcast %cst_23 : f32 to vector<128x128xf32>
    %38 = arith.cmpf ogt, %36, %37 : vector<128x128xf32>
    %cst_24 = arith.constant 2.000000e-01 : f32
    %39 = vector.broadcast %cst_24 : f32 to vector<128x128xf32>
    %40 = arith.mulf %39, %36 : vector<128x128xf32>
    %41 = arith.select %38, %36, %40 : vector<128x128xi1>, vector<128x128xf32>
    %cst_25 = arith.constant -1.000000e+30 : f32
    %42 = vector.broadcast %cst_25 : f32 to vector<128x128xf32>
    %43 = arith.select %2, %41, %42 : vector<128x128xi1>, vector<128x128xf32>
    %cst_26 = arith.constant dense<0xFF800000> : vector<128xf32>
    %44 = vector.multi_reduction <maximumf>, %43, %cst_26 [1] : vector<128x128xf32> to vector<128xf32>
    %45 = vector.shape_cast %44 : vector<128xf32> to vector<128x1xf32>
    %46 = vector.broadcast %45 : vector<128x1xf32> to vector<128x128xf32>
    %47 = arith.subf %43, %46 : vector<128x128xf32>
    %48 = math.exp %47 : vector<128x128xf32>
    %cst_27 = arith.constant 0.000000e+00 : f32
    %49 = vector.broadcast %cst_27 : f32 to vector<128x128xf32>
    %50 = arith.select %2, %48, %49 : vector<128x128xi1>, vector<128x128xf32>
    %cst_28 = arith.constant dense<0.000000e+00> : vector<128xf32>
    %51 = vector.multi_reduction <add>, %50, %cst_28 [1] : vector<128x128xf32> to vector<128xf32>
    %52 = vector.shape_cast %51 : vector<128xf32> to vector<128x1xf32>
    %53 = tpu.reciprocal %52 {approx = true} : vector<128x1xf32> -> vector<128x1xf32>
    %54 = vector.broadcast %53 : vector<128x1xf32> to vector<128x128xf32>
    %55 = arith.mulf %50, %54 : vector<128x128xf32>
    %56 = arith.truncf %55 : vector<128x128xf32> to vector<128x128xbf16>
    %57 = arith.truncf %24 : vector<128x128xf32> to vector<128x128xbf16>
    %cst_29 = arith.constant dense<0.000000e+00> : vector<128x128xf32>
    %58 = tpu.matmul %56, %57, %cst_29 {dimension_numbers = #tpu.dot_dimension_numbers<[1], [0], [0], [1], [0, 0, 1, 1], [], []>} : vector<128x128xbf16>, vector<128x128xbf16>, vector<128x128xf32> -> vector<128x128xf32>
    %59 = vector.broadcast %22 : vector<1x128xf32> to vector<128x128xf32>
    %60 = arith.addf %58, %59 : vector<128x128xf32>
    %cst_30 = arith.constant 0.000000e+00 : f32
    %61 = vector.broadcast %cst_30 : f32 to vector<128x128xf32>
    %62 = arith.maximumf %60, %61 : vector<128x128xf32>
    %c1_i32 = arith.constant 1 : i32
    %63 = arith.truncf %62 : vector<128x128xf32> to vector<128x128xbf16>
    %cst_31 = arith.constant dense<0.000000e+00> : vector<128x128xf32>
    %64 = tpu.matmul %63, %19, %cst_31 {dimension_numbers = #tpu.dot_dimension_numbers<[1], [0], [0], [1], [0, 0, 1, 1], [], []>} : vector<128x128xbf16>, vector<128x128xbf16>, vector<128x128xf32> -> vector<128x128xf32>
    %65 = vector.broadcast %20 : vector<1x128xf32> to vector<128x128xf32>
    %66 = arith.mulf %64, %65 : vector<128x128xf32>
    %cst_32 = arith.constant dense<0.000000e+00> : vector<128xf32>
    %67 = vector.multi_reduction <add>, %66, %cst_32 [1] : vector<128x128xf32> to vector<128xf32>
    %68 = vector.shape_cast %67 : vector<128xf32> to vector<128x1xf32>
    %69 = vector.broadcast %21 : vector<1x128xf32> to vector<128x128xf32>
    %70 = arith.mulf %64, %69 : vector<128x128xf32>
    %cst_33 = arith.constant dense<0.000000e+00> : vector<128xf32>
    %71 = vector.multi_reduction <add>, %70, %cst_33 [1] : vector<128x128xf32> to vector<128xf32>
    %72 = vector.shape_cast %71 : vector<128xf32> to vector<128x1xf32>
    %73 = tpu.transpose %68, [1, 0] : vector<128x1xf32> -> vector<1x128xf32>
    %74 = vector.broadcast %72 : vector<128x1xf32> to vector<128x128xf32>
    %75 = vector.broadcast %73 : vector<1x128xf32> to vector<128x128xf32>
    %76 = arith.addf %74, %75 : vector<128x128xf32>
    %cst_34 = arith.constant 0.000000e+00 : f32
    %77 = vector.broadcast %cst_34 : f32 to vector<128x128xf32>
    %78 = arith.cmpf ogt, %76, %77 : vector<128x128xf32>
    %cst_35 = arith.constant 2.000000e-01 : f32
    %79 = vector.broadcast %cst_35 : f32 to vector<128x128xf32>
    %80 = arith.mulf %79, %76 : vector<128x128xf32>
    %81 = arith.select %78, %76, %80 : vector<128x128xi1>, vector<128x128xf32>
    %cst_36 = arith.constant -1.000000e+30 : f32
    %82 = vector.broadcast %cst_36 : f32 to vector<128x128xf32>
    %83 = arith.select %2, %81, %82 : vector<128x128xi1>, vector<128x128xf32>
    %cst_37 = arith.constant dense<0xFF800000> : vector<128xf32>
    %84 = vector.multi_reduction <maximumf>, %83, %cst_37 [1] : vector<128x128xf32> to vector<128xf32>
    %85 = vector.shape_cast %84 : vector<128xf32> to vector<128x1xf32>
    %86 = vector.broadcast %85 : vector<128x1xf32> to vector<128x128xf32>
    %87 = arith.subf %83, %86 : vector<128x128xf32>
    %88 = math.exp %87 : vector<128x128xf32>
    %cst_38 = arith.constant 0.000000e+00 : f32
    %89 = vector.broadcast %cst_38 : f32 to vector<128x128xf32>
    %90 = arith.select %2, %88, %89 : vector<128x128xi1>, vector<128x128xf32>
    %cst_39 = arith.constant dense<0.000000e+00> : vector<128xf32>
    %91 = vector.multi_reduction <add>, %90, %cst_39 [1] : vector<128x128xf32> to vector<128xf32>
    %92 = vector.shape_cast %91 : vector<128xf32> to vector<128x1xf32>
    %93 = tpu.reciprocal %92 {approx = true} : vector<128x1xf32> -> vector<128x1xf32>
    %94 = vector.broadcast %93 : vector<128x1xf32> to vector<128x128xf32>
    %95 = arith.mulf %90, %94 : vector<128x128xf32>
    %96 = arith.truncf %95 : vector<128x128xf32> to vector<128x128xbf16>
    %97 = arith.truncf %64 : vector<128x128xf32> to vector<128x128xbf16>
    %cst_40 = arith.constant dense<0.000000e+00> : vector<128x128xf32>
    %98 = tpu.matmul %96, %97, %cst_40 {dimension_numbers = #tpu.dot_dimension_numbers<[1], [0], [0], [1], [0, 0, 1, 1], [], []>} : vector<128x128xbf16>, vector<128x128xbf16>, vector<128x128xf32> -> vector<128x128xf32>
    %99 = vector.broadcast %22 : vector<1x128xf32> to vector<128x128xf32>
    %100 = arith.addf %98, %99 : vector<128x128xf32>
    %cst_41 = arith.constant 0.000000e+00 : f32
    %101 = vector.broadcast %cst_41 : f32 to vector<128x128xf32>
    %102 = arith.maximumf %100, %101 : vector<128x128xf32>
    %103 = arith.truncf %102 : vector<128x128xf32> to vector<128x128xbf16>
    %c0_42 = arith.constant 0 : index
    %c0_43 = arith.constant 0 : index
    %104 = vector.load %arg9[%c0_42, %c0_43] : memref<128x128xbf16, #tpu.memory_space<vmem>>, vector<128x128xbf16>
    %cst_44 = arith.constant dense<0.000000e+00> : vector<128x128xf32>
    %105 = tpu.matmul %103, %104, %cst_44 {dimension_numbers = #tpu.dot_dimension_numbers<[1], [0], [0], [1], [0, 0, 1, 1], [], []>} : vector<128x128xbf16>, vector<128x128xbf16>, vector<128x128xf32> -> vector<128x128xf32>
    %106 = vector.broadcast %3 : vector<128x1xf32> to vector<128x128xf32>
    %107 = arith.mulf %106, %105 : vector<128x128xf32>
    %108 = arith.truncf %107 : vector<128x128xf32> to vector<128x128xbf16>
    %cst_45 = arith.constant dense<0.000000e+00> : vector<128x128xf32>
    %109 = tpu.matmul %0, %108, %cst_45 {dimension_numbers = #tpu.dot_dimension_numbers<[1], [0], [0], [1], [0, 0, 1, 1], [], []>} : vector<128x128xbf16>, vector<128x128xbf16>, vector<128x128xf32> -> vector<128x128xf32>
    %110 = vector.broadcast %3 : vector<128x1xf32> to vector<128x128xf32>
    %111 = arith.mulf %110, %109 : vector<128x128xf32>
    %c0_46 = arith.constant 0 : index
    %c0_47 = arith.constant 0 : index
    %112 = vector.load %arg10[%c0_46, %c0_47] : memref<1x128xf32, #tpu.memory_space<vmem>>, vector<1x128xf32>
    %113 = vector.broadcast %112 : vector<1x128xf32> to vector<128x128xf32>
    %114 = arith.addf %111, %113 : vector<128x128xf32>
    %115 = tpu.iota {dimensions = array<i32: 1>} : vector<128x128xi32>
    %c8_i32 = arith.constant 8 : i32
    %116 = vector.broadcast %c8_i32 : i32 to vector<128x128xi32>
    %117 = arith.cmpi slt, %115, %116 : vector<128x128xi32>
    %cst_48 = arith.constant -1.000000e+30 : f32
    %118 = vector.broadcast %cst_48 : f32 to vector<128x128xf32>
    %119 = arith.select %117, %114, %118 : vector<128x128xi1>, vector<128x128xf32>
    %cst_49 = arith.constant dense<0xFF800000> : vector<128xf32>
    %120 = vector.multi_reduction <maximumf>, %119, %cst_49 [1] : vector<128x128xf32> to vector<128xf32>
    %121 = vector.shape_cast %120 : vector<128xf32> to vector<128x1xf32>
    %122 = vector.broadcast %121 : vector<128x1xf32> to vector<128x128xf32>
    %123 = arith.subf %119, %122 : vector<128x128xf32>
    %124 = math.exp %123 : vector<128x128xf32>
    %cst_50 = arith.constant 0.000000e+00 : f32
    %125 = vector.broadcast %cst_50 : f32 to vector<128x128xf32>
    %126 = arith.select %117, %124, %125 : vector<128x128xi1>, vector<128x128xf32>
    %cst_51 = arith.constant dense<0.000000e+00> : vector<128xf32>
    %127 = vector.multi_reduction <add>, %126, %cst_51 [1] : vector<128x128xf32> to vector<128xf32>
    %128 = vector.shape_cast %127 : vector<128xf32> to vector<128x1xf32>
    %129 = math.log %128 : vector<128x1xf32>
    %130 = vector.broadcast %129 : vector<128x1xf32> to vector<128x128xf32>
    %131 = arith.subf %123, %130 : vector<128x128xf32>
    %c0_52 = arith.constant 0 : index
    %c0_53 = arith.constant 0 : index
    %132 = vector.load %arg11[%c0_52, %c0_53] : memref<128x128xf32, #tpu.memory_space<vmem>>, vector<128x128xf32>
    tpu.vector_store %arg11[%c0_52, %c0_53], %131 {strides = array<i32>} : memref<128x128xf32, #tpu.memory_space<vmem>>, vector<128x128xf32>,
    return
  }
}

</mosaic_0001>

<llo_original>
// kernel: gcn_net_forward.1
$region0: #{gcn_net_forward.1}
  #allocation0 [shape = 'u32[]', space=smem, size = 0x4, offset = 0x4, fixed_abs, tag = 'smem constant byte address 0x4 - core index']
  #allocation1 [shape = 'u32[144,128]{1,0:T(1,128)}', space=vmem, size = 0x12000, scoped, tag = 'internal scratch']
  %s0 = inlined_call_operand.hbm [shape: bf16[128,128], index: 0, kind: input, shape index: {}]
  %s1 = inlined_call_operand.hbm [shape: f32[128,1], index: 1, kind: input, shape index: {}]
  %s2 = inlined_call_operand.hbm [shape: f32[128,128], index: 2, kind: input, shape index: {}]
  %s3 = inlined_call_operand.hbm [shape: bf16[128,128], index: 3, kind: input, shape index: {}]
  %s4 = inlined_call_operand.hbm [shape: f32[1,128], index: 4, kind: input, shape index: {}]
  %s5 = inlined_call_operand.hbm [shape: bf16[128,128], index: 5, kind: input, shape index: {}]
  %s6 = inlined_call_operand.hbm [shape: f32[1,128], index: 6, kind: input, shape index: {}]
  %s7 = inlined_call_operand.hbm [shape: f32[1,128], index: 7, kind: input, shape index: {}]
  %s8 = inlined_call_operand.hbm [shape: f32[1,128], index: 8, kind: input, shape index: {}]
  %s9 = inlined_call_operand.hbm [shape: bf16[128,128], index: 9, kind: input, shape index: {}]
  %s10 = inlined_call_operand.hbm [shape: f32[1,128], index: 10, kind: input, shape index: {}]
  %s11 = inlined_call_operand.hbm [shape: f32[128,128], index: 11, kind: output, shape index: {}]
  %s12 = sld [smem:[#allocation0]]
  $region98: #{gcn_net_forward.1} parent=0
    _
  %s14 = ssub.s32 1, %s12
  %s15 = scalar_select 0, %s14, %s12
  $region1: #{gcn_net_forward.1} parent=0
    #allocation2 [shape = 'u8[32768]{0}', space=vmem, size = 0x8000, scoped, tag = 'input window, operand 0, single buffered']
    #allocation3 [shape = 's32[1]{0}', space=sflag, size = 0x4, scoped, tag = 'scoped memory for gcn_net_forward.1']
    #allocation4 [shape = 's32[1]{0}', space=sflag, size = 0x4, scoped, tag = 'scoped memory for gcn_net_forward.1']
    #allocation5 [shape = 'u8[65536]{0}', space=vmem, size = 0x10000, scoped, tag = 'input window, operand 1, single buffered']
    #allocation6 [shape = 's32[1]{0}', space=sflag, size = 0x4, scoped, tag = 'scoped memory for gcn_net_forward.1']
    #allocation7 [shape = 'u8[65536]{0}', space=vmem, size = 0x10000, scoped, tag = 'input window, operand 2, single buffered']
    #allocation8 [shape = 'u8[32768]{0}', space=vmem, size = 0x8000, scoped, tag = 'input window, operand 3, single buffered']
    #allocation9 [shape = 's32[1]{0}', space=sflag, size = 0x4, scoped, tag = 'scoped memory for gcn_net_forward.1']
    #allocation10 [shape = 'u8[512]{0}', space=vmem, size = 0x400, scoped, tag = 'input window, operand 4, single buffered']
    #allocation11 [shape = 'u8[32768]{0}', space=vmem, size = 0x8000, scoped, tag = 'input window, operand 5, single buffered']
    #allocation12 [shape = 's32[1]{0}', space=sflag, size = 0x4, scoped, tag = 'scoped memory for gcn_net_forward.1']
    #allocation13 [shape = 'u8[512]{0}', space=vmem, size = 0x400, scoped, tag = 'input window, operand 6, single buffered']
    #allocation14 [shape = 'u8[512]{0}', space=vmem, size = 0x400, scoped, tag = 'input window, operand 7, single buffered']
    #allocation15 [shape = 's32[1]{0}', space=sflag, size = 0x4, scoped, tag = 'scoped memory for gcn_net_forward.1']
    #allocation16 [shape = 'u8[512]{0}', space=vmem, size = 0x400, scoped, tag = 'input window, operand 8, single buffered']
    #allocation17 [shape = 'u8[32768]{0}', space=vmem, size = 0x8000, scoped, tag = 'input window, operand 9, single buffered']
    #allocation18 [shape = 's32[1]{0}', space=sflag, size = 0x4, scoped, tag = 'scoped memory for gcn_net_forward.1']
    #allocation19 [shape = 'u8[512]{0}', space=vmem, size = 0x400, scoped, tag = 'input window, operand 10, single buffered']
    #allocation20 [shape = 'u8[65536]{0}', space=vmem, size = 0x10000, scoped, tag = 'output window, operand 0, single buffered']
    %16 = vsyncpa [#allocation3], 0
    %17 = vsyncpa [#allocation6], 0
    %18 = vsyncpa [#allocation9], 0
    %19 = vsyncpa [#allocation12], 0
    %20 = vsyncpa [#allocation15], 0
    %21 = vsyncpa [#allocation18], 0
    %22 = vsyncpa [#allocation4], 0
    // Predicated region
    $region2: #{gcn_net_forward.1} parent=1 // pred_check
      _
    $region3: #{gcn_net_forward.1} parent=1 // pred_check_branch
      %24 = sbr.rel (0) target = $region5
    $region4: #{gcn_net_forward.1} parent=1 // pred_region
      %s26 = ssub.s32 1024, 1024
      %27 = vsyncadd [#allocation3], %s26
      %s28 = sshll.u32 [#allocation2], 4
      %s29 = int_to_ptr.vmem [resolvable:$true] %s28
      %34 = dma.hbm_to_vmem [thread:$0]  %s0, 1024, %s29, [#allocation3], 64, 64, 4
    $region5: #{gcn_net_forward.1} parent=1 // pred_fallthru
      _
    // Predicated region
    $region6: #{gcn_net_forward.1} parent=1 // pred_check
      _
    $region7: #{gcn_net_forward.1} parent=1 // pred_check_branch
      %36 = sbr.rel (0) target = $region9
    $region8: #{gcn_net_forward.1} parent=1 // pred_region
      %s38 = ssub.s32 2048, 2048
      %39 = vsyncadd [#allocation6], %s38
      %s40 = sshll.u32 [#allocation5], 4
      %s41 = int_to_ptr.vmem [resolvable:$true] %s40
      %46 = dma.hbm_to_vmem [thread:$0]  %s1, 2048, %s41, [#allocation6], 128, 128, 8
    $region9: #{gcn_net_forward.1} parent=1 // pred_fallthru
      _
    // Predicated region
    $region10: #{gcn_net_forward.1} parent=1 // pred_check
      _
    $region11: #{gcn_net_forward.1} parent=1 // pred_check_branch
      %48 = sbr.rel (0) target = $region13
    $region12: #{gcn_net_forward.1} parent=1 // pred_region
      %s50 = ssub.s32 2048, 2048
      %51 = vsyncadd [#allocation6], %s50
      %s52 = sshll.u32 [#allocation7], 4
      %s53 = int_to_ptr.vmem [resolvable:$true] %s52
      %58 = dma.hbm_to_vmem [thread:$0]  %s2, 2048, %s53, [#allocation6], 128, 128, 8
    $region13: #{gcn_net_forward.1} parent=1 // pred_fallthru
      _
    // Predicated region
    $region14: #{gcn_net_forward.1} parent=1 // pred_check
      _
    $region15: #{gcn_net_forward.1} parent=1 // pred_check_branch
      %60 = sbr.rel (0) target = $region17
    $region16: #{gcn_net_forward.1} parent=1 // pred_region
      %s62 = ssub.s32 1024, 1024
      %63 = vsyncadd [#allocation9], %s62
      %s64 = sshll.u32 [#allocation8], 4
      %s65 = int_to_ptr.vmem [resolvable:$true] %s64
      %70 = dma.hbm_to_vmem [thread:$0]  %s3, 1024, %s65, [#allocation9], 64, 64, 4
    $region17: #{gcn_net_forward.1} parent=1 // pred_fallthru
      _
    // Predicated region
    $region18: #{gcn_net_forward.1} parent=1 // pred_check
      _
    $region19: #{gcn_net_forward.1} parent=1 // pred_check_branch
      %72 = sbr.rel (0) target = $region21
    $region20: #{gcn_net_forward.1} parent=1 // pred_region
      %s74 = ssub.s32 16, 16
      %75 = vsyncadd [#allocation9], %s74
      %s77 = sshll.u32 [#allocation10], 4
      %s78 = int_to_ptr.vmem [resolvable:$true] %s77
      %80 = dma.hbm_to_vmem [thread:$0]  %s4, 16, %s78, [#allocation9]
    $region21: #{gcn_net_forward.1} parent=1 // pred_fallthru
      _
    // Predicated region
    $region22: #{gcn_net_forward.1} parent=1 // pred_check
      _
    $region23: #{gcn_net_forward.1} parent=1 // pred_check_branch
      %82 = sbr.rel (0) target = $region25
    $region24: #{gcn_net_forward.1} parent=1 // pred_region
      %s84 = ssub.s32 1024, 1024
      %85 = vsyncadd [#allocation12], %s84
      %s86 = sshll.u32 [#allocation11], 4
      %s87 = int_to_ptr.vmem [resolvable:$true] %s86
      %92 = dma.hbm_to_vmem [thread:$0]  %s5, 1024, %s87, [#allocation12], 64, 64, 4
    $region25: #{gcn_net_forward.1} parent=1 // pred_fallthru
      _
    // Predicated region
    $region26: #{gcn_net_forward.1} parent=1 // pred_check
      _
    $region27: #{gcn_net_forward.1} parent=1 // pred_check_branch
      %94 = sbr.rel (0) target = $region29
    $region28: #{gcn_net_forward.1} parent=1 // pred_region
      %s96 = ssub.s32 16, 16
      %97 = vsyncadd [#allocation12], %s96
      %s99 = sshll.u32 [#allocation13], 4
      %s100 = int_to_ptr.vmem [resolvable:$true] %s99
      %102 = dma.hbm_to_vmem [thread:$0]  %s6, 16, %s100, [#allocation12]
    $region29: #{gcn_net_forward.1} parent=1 // pred_fallthru
      _
    // Predicated region
    $region30: #{gcn_net_forward.1} parent=1 // pred_check
      _
    $region31: #{gcn_net_forward.1} parent=1 // pred_check_branch
      %104 = sbr.rel (0) target = $region33
    $region32: #{gcn_net_forward.1} parent=1 // pred_region
      %s106 = ssub.s32 16, 16
      %107 = vsyncadd [#allocation15], %s106
      %s109 = sshll.u32 [#allocation14], 4
      %s110 = int_to_ptr.vmem [resolvable:$true] %s109
      %112 = dma.hbm_to_vmem [thread:$0]  %s7, 16, %s110, [#allocation15]
    $region33: #{gcn_net_forward.1} parent=1 // pred_fallthru
      _
    // Predicated region
    $region34: #{gcn_net_forward.1} parent=1 // pred_check
      _
    $region35: #{gcn_net_forward.1} parent=1 // pred_check_branch
      %114 = sbr.rel (0) target = $region37
    $region36: #{gcn_net_forward.1} parent=1 // pred_region
      %s116 = ssub.s32 16, 16
      %117 = vsyncadd [#allocation15], %s116
      %s119 = sshll.u32 [#allocation16], 4
      %s120 = int_to_ptr.vmem [resolvable:$true] %s119
      %122 = dma.hbm_to_vmem [thread:$0]  %s8, 16, %s120, [#allocation15]
    $region37: #{gcn_net_forward.1} parent=1 // pred_fallthru
      _
    // Predicated region
    $region38: #{gcn_net_forward.1} parent=1 // pred_check
      _
    $region39: #{gcn_net_forward.1} parent=1 // pred_check_branch
      %124 = sbr.rel (0) target = $region41
    $region40: #{gcn_net_forward.1} parent=1 // pred_region
      %s126 = ssub.s32 1024, 1024
      %127 = vsyncadd [#allocation18], %s126
      %s128 = sshll.u32 [#allocation17], 4
      %s129 = int_to_ptr.vmem [resolvable:$true] %s128
      %134 = dma.hbm_to_vmem [thread:$0]  %s9, 1024, %s129, [#allocation18], 64, 64, 4
    $region41: #{gcn_net_forward.1} parent=1 // pred_fallthru
      _
    // Predicated region
    $region42: #{gcn_net_forward.1} parent=1 // pred_check
      _
    $region43: #{gcn_net_forward.1} parent=1 // pred_check_branch
      %136 = sbr.rel (0) target = $region45
    $region44: #{gcn_net_forward.1} parent=1 // pred_region
      %s138 = ssub.s32 16, 16
      %139 = vsyncadd [#allocation18], %s138
      %s141 = sshll.u32 [#allocation19], 4
      %s142 = int_to_ptr.vmem [resolvable:$true] %s141
      %144 = dma.hbm_to_vmem [thread:$0]  %s10, 16, %s142, [#allocation18]
    $region45: #{gcn_net_forward.1} parent=1 // pred_fallthru
      _
    // Predicated region
    $region46: #{gcn_net_forward.1} parent=1 // pred_check
      _
    $region47: #{gcn_net_forward.1} parent=1 // pred_check_branch
      %146 = sbr.rel (0) target = $region49
    $region48: #{gcn_net_forward.1} parent=1 // pred_region
      %147 = dma.done [#allocation3], 1024
    $region49: #{gcn_net_forward.1} parent=1 // pred_fallthru
      _
    // Predicated region
    $region50: #{gcn_net_forward.1} parent=1 // pred_check
      _
    $region51: #{gcn_net_forward.1} parent=1 // pred_check_branch
      %149 = sbr.rel (0) target = $region53
    $region52: #{gcn_net_forward.1} parent=1 // pred_region
      %150 = dma.done [#allocation6], 2048
    $region53: #{gcn_net_forward.1} parent=1 // pred_fallthru
      _
    // Predicated region
    $region54: #{gcn_net_forward.1} parent=1 // pred_check
      _
    $region55: #{gcn_net_forward.1} parent=1 // pred_check_branch
      %152 = sbr.rel (0) target = $region57
    $region56: #{gcn_net_forward.1} parent=1 // pred_region
      %153 = dma.done [#allocation6], 2048
    $region57: #{gcn_net_forward.1} parent=1 // pred_fallthru
      _
    // Predicated region
    $region58: #{gcn_net_forward.1} parent=1 // pred_check
      _
    $region59: #{gcn_net_forward.1} parent=1 // pred_check_branch
      %155 = sbr.rel (0) target = $region61
    $region60: #{gcn_net_forward.1} parent=1 // pred_region
      %156 = dma.done [#allocation9], 1024
    $region61: #{gcn_net_forward.1} parent=1 // pred_fallthru
      _
    // Predicated region
    $region62: #{gcn_net_forward.1} parent=1 // pred_check
      _
    $region63: #{gcn_net_forward.1} parent=1 // pred_check_branch
      %158 = sbr.rel (0) target = $region65
    $region64: #{gcn_net_forward.1} parent=1 // pred_region
      %159 = dma.done [#allocation9], 16
    $region65: #{gcn_net_forward.1} parent=1 // pred_fallthru
      _
    // Predicated region
    $region66: #{gcn_net_forward.1} parent=1 // pred_check
      _
    $region67: #{gcn_net_forward.1} parent=1 // pred_check_branch
      %161 = sbr.rel (0) target = $region69
    $region68: #{gcn_net_forward.1} parent=1 // pred_region
      %162 = dma.done [#allocation12], 1024
    $region69: #{gcn_net_forward.1} parent=1 // pred_fallthru
      _
    // Predicated region
    $region70: #{gcn_net_forward.1} parent=1 // pred_check
      _
    $region71: #{gcn_net_forward.1} parent=1 // pred_check_branch
      %164 = sbr.rel (0) target = $region73
    $region72: #{gcn_net_forward.1} parent=1 // pred_region
      %165 = dma.done [#allocation12], 16
    $region73: #{gcn_net_forward.1} parent=1 // pred_fallthru
      _
    // Predicated region
    $region74: #{gcn_net_forward.1} parent=1 // pred_check
      _
    $region75: #{gcn_net_forward.1} parent=1 // pred_check_branch
      %167 = sbr.rel (0) target = $region77
    $region76: #{gcn_net_forward.1} parent=1 // pred_region
      %168 = dma.done [#allocation15], 16
    $region77: #{gcn_net_forward.1} parent=1 // pred_fallthru
      _
    // Predicated region
    $region78: #{gcn_net_forward.1} parent=1 // pred_check
      _
    $region79: #{gcn_net_forward.1} parent=1 // pred_check_branch
      %170 = sbr.rel (0) target = $region81
    $region80: #{gcn_net_forward.1} parent=1 // pred_region
      %171 = dma.done [#allocation15], 16
    $region81: #{gcn_net_forward.1} parent=1 // pred_fallthru
      _
    // Predicated region
    $region82: #{gcn_net_forward.1} parent=1 // pred_check
      _
    $region83: #{gcn_net_forward.1} parent=1 // pred_check_branch
      %173 = sbr.rel (0) target = $region85
    $region84: #{gcn_net_forward.1} parent=1 // pred_region
      %174 = dma.done [#allocation18], 1024
    $region85: #{gcn_net_forward.1} parent=1 // pred_fallthru
      _
    // Predicated region
    $region86: #{gcn_net_forward.1} parent=1 // pred_check
      _
    $region87: #{gcn_net_forward.1} parent=1 // pred_check_branch
      %176 = sbr.rel (0) target = $region89
    $region88: #{gcn_net_forward.1} parent=1 // pred_region
      %177 = dma.done [#allocation18], 16
    $region89: #{gcn_net_forward.1} parent=1 // pred_fallthru
      _
    %v181 = vld [vmem:[#allocation2] sm:$0xf]
    %v182 = vld [vmem:[#allocation2 + $0x4] sm:$0xf]
    %v183 = vld [vmem:[#allocation2 + $0x8] sm:$0xf]
    %v184 = vld [vmem:[#allocation2 + $0xc] sm:$0xf]
    %v185 = vld [vmem:[#allocation2 + $0x10] sm:$0xf]
    %v186 = vld [vmem:[#allocation2 + $0x14] sm:$0xf]
    %v187 = vld [vmem:[#allocation2 + $0x18] sm:$0xf]
    %v188 = vld [vmem:[#allocation2 + $0x1c] sm:$0xf]
    %v189 = vld [vmem:[#allocation2 + $0x20] sm:$0xf]
    %v190 = vld [vmem:[#allocation2 + $0x24] sm:$0xf]
    %v191 = vld [vmem:[#allocation2 + $0x28] sm:$0xf]
    %v192 = vld [vmem:[#allocation2 + $0x2c] sm:$0xf]
    %v193 = vld [vmem:[#allocation2 + $0x30] sm:$0xf]
    %v194 = vld [vmem:[#allocation2 + $0x34] sm:$0xf]
    %v195 = vld [vmem:[#allocation2 + $0x38] sm:$0xf]
    %v196 = vld [vmem:[#allocation2 + $0x3c] sm:$0xf]
    %vm197 = vcmp.ne.bf16.partialorder %v181, 0
    %vm198 = vcmp.ne.bf16.partialorder %v182, 0
    %vm199 = vcmp.ne.bf16.partialorder %v183, 0
    %vm200 = vcmp.ne.bf16.partialorder %v184, 0
    %vm201 = vcmp.ne.bf16.partialorder %v185, 0
    %vm202 = vcmp.ne.bf16.partialorder %v186, 0
    %vm203 = vcmp.ne.bf16.partialorder %v187, 0
    %vm204 = vcmp.ne.bf16.partialorder %v188, 0
    %vm205 = vcmp.ne.bf16.partialorder %v189, 0
    %vm206 = vcmp.ne.bf16.partialorder %v190, 0
    %vm207 = vcmp.ne.bf16.partialorder %v191, 0
    %vm208 = vcmp.ne.bf16.partialorder %v192, 0
    %vm209 = vcmp.ne.bf16.partialorder %v193, 0
    %vm210 = vcmp.ne.bf16.partialorder %v194, 0
    %vm211 = vcmp.ne.bf16.partialorder %v195, 0
    %vm212 = vcmp.ne.bf16.partialorder %v196, 0
    %v213 = vld [vmem:[#allocation5] sm:$0xff]
    %v214 = vld [vmem:[#allocation5 + $0x8] sm:$0xff]
    %v215 = vld [vmem:[#allocation5 + $0x10] sm:$0xff]
    %v216 = vld [vmem:[#allocation5 + $0x18] sm:$0xff]
    %v217 = vld [vmem:[#allocation5 + $0x20] sm:$0xff]
    %v218 = vld [vmem:[#allocation5 + $0x28] sm:$0xff]
    %v219 = vld [vmem:[#allocation5 + $0x30] sm:$0xff]
    %v220 = vld [vmem:[#allocation5 + $0x38] sm:$0xff]
    %v221 = vld [vmem:[#allocation5 + $0x40] sm:$0xff]
    %v222 = vld [vmem:[#allocation5 + $0x48] sm:$0xff]
    %v223 = vld [vmem:[#allocation5 + $0x50] sm:$0xff]
    %v224 = vld [vmem:[#allocation5 + $0x58] sm:$0xff]
    %v225 = vld [vmem:[#allocation5 + $0x60] sm:$0xff]
    %v226 = vld [vmem:[#allocation5 + $0x68] sm:$0xff]
    %v227 = vld [vmem:[#allocation5 + $0x70] sm:$0xff]
    %v228 = vld [vmem:[#allocation5 + $0x78] sm:$0xff]
    %v229 = vld [vmem:[#allocation7] sm:$0xff]
    %v230 = vld [vmem:[#allocation7 + $0x8] sm:$0xff]
    %v231 = vld [vmem:[#allocation7 + $0x10] sm:$0xff]
    %v232 = vld [vmem:[#allocation7 + $0x18] sm:$0xff]
    %v233 = vld [vmem:[#allocation7 + $0x20] sm:$0xff]
    %v234 = vld [vmem:[#allocation7 + $0x28] sm:$0xff]
    %v235 = vld [vmem:[#allocation7 + $0x30] sm:$0xff]
    %v236 = vld [vmem:[#allocation7 + $0x38] sm:$0xff]
    %v237 = vld [vmem:[#allocation7 + $0x40] sm:$0xff]
    %v238 = vld [vmem:[#allocation7 + $0x48] sm:$0xff]
    %v239 = vld [vmem:[#allocation7 + $0x50] sm:$0xff]
    %v240 = vld [vmem:[#allocation7 + $0x58] sm:$0xff]
    %v241 = vld [vmem:[#allocation7 + $0x60] sm:$0xff]
    %v242 = vld [vmem:[#allocation7 + $0x68] sm:$0xff]
    %v243 = vld [vmem:[#allocation7 + $0x70] sm:$0xff]
    %v244 = vld [vmem:[#allocation7 + $0x78] sm:$0xff]
    %v245 = vpack.c.bf16 %v230, %v229
    %v246 = vpack.c.bf16 %v232, %v231
    %v247 = vpack.c.bf16 %v234, %v233
    %v248 = vpack.c.bf16 %v236, %v235
    %v249 = vpack.c.bf16 %v238, %v237
    %v250 = vpack.c.bf16 %v240, %v239
    %v251 = vpack.c.bf16 %v242, %v241
    %v252 = vpack.c.bf16 %v244, %v243
    %v253 = vld [vmem:[#allocation8] sm:$0xf]
    %v254 = vld [vmem:[#allocation8 + $0x4] sm:$0xf]
    %v255 = vld [vmem:[#allocation8 + $0x8] sm:$0xf]
    %v256 = vld [vmem:[#allocation8 + $0xc] sm:$0xf]
    %v257 = vld [vmem:[#allocation8 + $0x10] sm:$0xf]
    %v258 = vld [vmem:[#allocation8 + $0x14] sm:$0xf]
    %v259 = vld [vmem:[#allocation8 + $0x18] sm:$0xf]
    %v260 = vld [vmem:[#allocation8 + $0x1c] sm:$0xf]
    %v261 = vld [vmem:[#allocation8 + $0x20] sm:$0xf]
    %v262 = vld [vmem:[#allocation8 + $0x24] sm:$0xf]
    %v263 = vld [vmem:[#allocation8 + $0x28] sm:$0xf]
    %v264 = vld [vmem:[#allocation8 + $0x2c] sm:$0xf]
    %v265 = vld [vmem:[#allocation8 + $0x30] sm:$0xf]
    %v266 = vld [vmem:[#allocation8 + $0x34] sm:$0xf]
    %v267 = vld [vmem:[#allocation8 + $0x38] sm:$0xf]
    %v268 = vld [vmem:[#allocation8 + $0x3c] sm:$0xf]
    %v285 = vunpack.c.l.b16 %v253
    %v286 = vunpack.c.l.b16 %v254
    %v287 = vunpack.c.l.b16 %v255
    %v288 = vunpack.c.l.b16 %v256
    %v289 = vunpack.c.l.b16 %v257
    %v290 = vunpack.c.l.b16 %v258
    %v291 = vunpack.c.l.b16 %v259
    %v292 = vunpack.c.l.b16 %v260
    %v293 = vunpack.c.l.b16 %v261
    %v294 = vunpack.c.l.b16 %v262
    %v295 = vunpack.c.l.b16 %v263
    %v296 = vunpack.c.l.b16 %v264
    %v297 = vunpack.c.l.b16 %v265
    %v298 = vunpack.c.l.b16 %v266
    %v299 = vunpack.c.l.b16 %v267
    %v300 = vunpack.c.l.b16 %v268
    %v301 = vpack.c.b16 %v286, %v285
    %v302 = vpack.c.b16 %v288, %v287
    %v303 = vpack.c.b16 %v290, %v289
    %v304 = vpack.c.b16 %v292, %v291
    %v305 = vpack.c.b16 %v294, %v293
    %v306 = vpack.c.b16 %v296, %v295
    %v307 = vpack.c.b16 %v298, %v297
    %v308 = vpack.c.b16 %v300, %v299
    %317 = vmatprep.subr.bf16.mxu0 0
    %318 = vmatpush1.bf16.msra.mxu0 %v301
    %319 = vmatprep.subr.bf16.mxu0 0
    %320 = vmatpush1.bf16.msra.mxu0 %v302
    %321 = vmatprep.subr.bf16.mxu0 0
    %322 = vmatpush1.bf16.msra.mxu0 %v303
    %323 = vmatprep.subr.bf16.mxu0 0
    %324 = vmatpush1.bf16.msra.mxu0 %v304
    %325 = vmatprep.subr.bf16.mxu0 0
    %326 = vmatpush1.bf16.msra.mxu0 %v305
    %327 = vmatprep.subr.bf16.mxu0 0
    %328 = vmatpush1.bf16.msra.mxu0 %v306
    %329 = vmatprep.subr.bf16.mxu0 0
    %330 = vmatpush1.bf16.msra.mxu0 %v307
    %331 = vmatprep.subr.bf16.mxu0 0
    %332 = vmatpush1.bf16.msra.mxu0 %v308
    %333 = vmatprep.subr.bf16.mxu0 0
    %334 = vmatpush1.bf16.msra.mxu0 0
    %335 = vmatprep.subr.bf16.mxu0 0
    %336 = vmatpush1.bf16.msra.mxu0 0
    %337 = vmatprep.subr.bf16.mxu0 0
    %338 = vmatpush1.bf16.msra.mxu0 0
    %339 = vmatprep.subr.bf16.mxu0 0
    %340 = vmatpush1.bf16.msra.mxu0 0
    %341 = vmatprep.subr.bf16.mxu0 0
    %342 = vmatpush1.bf16.msra.mxu0 0
    %343 = vmatprep.subr.bf16.mxu0 0
    %344 = vmatpush1.bf16.msra.mxu0 0
    %345 = vmatprep.subr.bf16.mxu0 0
    %346 = vmatpush1.bf16.msra.mxu0 0
    %347 = vmatprep.subr.bf16.mxu0 0
    %348 = vmatpush1.bf16.msra.mxu0 0
    %349 = vmatprep.mubr.bf16.mxu0 0
    %350 = vmatmul.mubr.bf16.gmra.mrb[0].mxu0 %v245
    %v351 = vpop.f32.mrb[0].mxu0
    %v352 = vadd.f32 0.0, %v351
    %v353 = vpop.f32.mrb[0].mxu0
    %v354 = vpop.f32.mrb[0].mxu0
    %v355 = vadd.f32 0.0, %v354
    %v356 = vpop.f32.mrb[0].mxu0
    %357 = vmatprep.mubr.bf16.mxu0 0
    %358 = vmatmul.mubr.bf16.gmra.mrb[0].mxu0 %v246
    %v359 = vpop.f32.mrb[0].mxu0
    %v360 = vadd.f32 0.0, %v359
    %v361 = vpop.f32.mrb[0].mxu0
    %v362 = vpop.f32.mrb[0].mxu0
    %v363 = vadd.f32 0.0, %v362
    %v364 = vpop.f32.mrb[0].mxu0
    %365 = vmatprep.mubr.bf16.mxu0 0
    %366 = vmatmul.mubr.bf16.gmra.mrb[0].mxu0 %v247
    %v367 = vpop.f32.mrb[0].mxu0
    %v368 = vadd.f32 0.0, %v367
    %v369 = vpop.f32.mrb[0].mxu0
    %v370 = vpop.f32.mrb[0].mxu0
    %v371 = vadd.f32 0.0, %v370
    %v372 = vpop.f32.mrb[0].mxu0
    %373 = vmatprep.mubr.bf16.mxu0 0
    %374 = vmatmul.mubr.bf16.gmra.mrb[0].mxu0 %v248
    %v375 = vpop.f32.mrb[0].mxu0
    %v376 = vadd.f32 0.0, %v375
    %v377 = vpop.f32.mrb[0].mxu0
    %v378 = vpop.f32.mrb[0].mxu0
    %v379 = vadd.f32 0.0, %v378
    %v380 = vpop.f32.mrb[0].mxu0
    %381 = vmatprep.mubr.bf16.mxu0 0
    %382 = vmatmul.mubr.bf16.gmra.mrb[0].mxu0 %v249
    %v383 = vpop.f32.mrb[0].mxu0
    %v384 = vadd.f32 0.0, %v383
    %v385 = vpop.f32.mrb[0].mxu0
    %v386 = vpop.f32.mrb[0].mxu0
    %v387 = vadd.f32 0.0, %v386
    %v388 = vpop.f32.mrb[0].mxu0
    %389 = vmatprep.mubr.bf16.mxu0 0
    %390 = vmatmul.mubr.bf16.gmra.mrb[0].mxu0 %v250
    %v391 = vpop.f32.mrb[0].mxu0
    %v392 = vadd.f32 0.0, %v391
    %v393 = vpop.f32.mrb[0].mxu0
    %v394 = vpop.f32.mrb[0].mxu0
    %v395 = vadd.f32 0.0, %v394
    %v396 = vpop.f32.mrb[0].mxu0
    %397 = vmatprep.mubr.bf16.mxu0 0
    %398 = vmatmul.mubr.bf16.gmra.mrb[0].mxu0 %v251
    %v399 = vpop.f32.mrb[0].mxu0
    %v400 = vadd.f32 0.0, %v399
    %v401 = vpop.f32.mrb[0].mxu0
    %v402 = vpop.f32.mrb[0].mxu0
    %v403 = vadd.f32 0.0, %v402
    %v404 = vpop.f32.mrb[0].mxu0
    %405 = vmatprep.mubr.bf16.mxu0 0
    %406 = vmatmul.mubr.bf16.gmra.mrb[0].mxu0 %v252
    %v407 = vpop.f32.mrb[0].mxu0
    %v408 = vadd.f32 0.0, %v407
    %v409 = vpop.f32.mrb[0].mxu0
    %v410 = vpop.f32.mrb[0].mxu0
    %v411 = vadd.f32 0.0, %v410
    %v412 = vpop.f32.mrb[0].mxu0
    %413 = vdwg.mxu0
    %415 = vset.pattern.permute.xlu0 0
    %416 = vperm.xlu0 %415, %v213
    %v417 = vpop.permute.xlu0 %416
    %420 = vset.pattern.permute.xlu0 0
    %421 = vperm.xlu0 %420, %v214
    %v422 = vpop.permute.xlu0 %421
    %425 = vset.pattern.permute.xlu0 0
    %426 = vperm.xlu0 %425, %v215
    %v427 = vpop.permute.xlu0 %426
    %430 = vset.pattern.permute.xlu0 0
    %431 = vperm.xlu0 %430, %v216
    %v432 = vpop.permute.xlu0 %431
    %435 = vset.pattern.permute.xlu0 0
    %436 = vperm.xlu0 %435, %v217
    %v437 = vpop.permute.xlu0 %436
    %440 = vset.pattern.permute.xlu0 0
    %441 = vperm.xlu0 %440, %v218
    %v442 = vpop.permute.xlu0 %441
    %445 = vset.pattern.permute.xlu0 0
    %446 = vperm.xlu0 %445, %v219
    %v447 = vpop.permute.xlu0 %446
    %450 = vset.pattern.permute.xlu0 0
    %451 = vperm.xlu0 %450, %v220
    %v452 = vpop.permute.xlu0 %451
    %455 = vset.pattern.permute.xlu0 0
    %456 = vperm.xlu0 %455, %v221
    %v457 = vpop.permute.xlu0 %456
    %460 = vset.pattern.permute.xlu0 0
    %461 = vperm.xlu0 %460, %v222
    %v462 = vpop.permute.xlu0 %461
    %465 = vset.pattern.permute.xlu0 0
    %466 = vperm.xlu0 %465, %v223
    %v467 = vpop.permute.xlu0 %466
    %470 = vset.pattern.permute.xlu0 0
    %471 = vperm.xlu0 %470, %v224
    %v472 = vpop.permute.xlu0 %471
    %475 = vset.pattern.permute.xlu0 0
    %476 = vperm.xlu0 %475, %v225
    %v477 = vpop.permute.xlu0 %476
    %480 = vset.pattern.permute.xlu0 0
    %481 = vperm.xlu0 %480, %v226
    %v482 = vpop.permute.xlu0 %481
    %485 = vset.pattern.permute.xlu0 0
    %486 = vperm.xlu0 %485, %v227
    %v487 = vpop.permute.xlu0 %486
    %490 = vset.pattern.permute.xlu0 0
    %491 = vperm.xlu0 %490, %v228
    %v492 = vpop.permute.xlu0 %491
    %v494 = vmul.f32 %v417, %v352
    %v495 = vmul.f32 %v422, %v355
    %v496 = vmul.f32 %v427, %v360
    %v497 = vmul.f32 %v432, %v363
    %v498 = vmul.f32 %v437, %v368
    %v499 = vmul.f32 %v442, %v371
    %v500 = vmul.f32 %v447, %v376
    %v501 = vmul.f32 %v452, %v379
    %v502 = vmul.f32 %v457, %v384
    %v503 = vmul.f32 %v462, %v387
    %v504 = vmul.f32 %v467, %v392
    %v505 = vmul.f32 %v472, %v395
    %v506 = vmul.f32 %v477, %v400
    %v507 = vmul.f32 %v482, %v403
    %v508 = vmul.f32 %v487, %v408
    %v509 = vmul.f32 %v492, %v411
    %v510 = vpack.c.bf16 %v495, %v494
    %v511 = vpack.c.bf16 %v497, %v496
    %v512 = vpack.c.bf16 %v499, %v498
    %v513 = vpack.c.bf16 %v501, %v500
    %v514 = vpack.c.bf16 %v503, %v502
    %v515 = vpack.c.bf16 %v505, %v504
    %v516 = vpack.c.bf16 %v507, %v506
    %v517 = vpack.c.bf16 %v509, %v508
    %v534 = vunpack.c.l.b16 %v181
    %v535 = vunpack.c.l.b16 %v182
    %v536 = vunpack.c.l.b16 %v183
    %v537 = vunpack.c.l.b16 %v184
    %v538 = vunpack.c.l.b16 %v185
    %v539 = vunpack.c.l.b16 %v186
    %v540 = vunpack.c.l.b16 %v187
    %v541 = vunpack.c.l.b16 %v188
    %v542 = vunpack.c.l.b16 %v189
    %v543 = vunpack.c.l.b16 %v190
    %v544 = vunpack.c.l.b16 %v191
    %v545 = vunpack.c.l.b16 %v192
    %v546 = vunpack.c.l.b16 %v193
    %v547 = vunpack.c.l.b16 %v194
    %v548 = vunpack.c.l.b16 %v195
    %v549 = vunpack.c.l.b16 %v196
    %v550 = vpack.c.b16 %v535, %v534
    %v551 = vpack.c.b16 %v537, %v536
    %v552 = vpack.c.b16 %v539, %v538
    %v553 = vpack.c.b16 %v541, %v540
    %v554 = vpack.c.b16 %v543, %v542
    %v555 = vpack.c.b16 %v545, %v544
    %v556 = vpack.c.b16 %v547, %v546
    %v557 = vpack.c.b16 %v549, %v548
    %566 = vmatprep.subr.bf16.mxu0 0
    %567 = vmatpush1.bf16.msra.mxu0 %v510
    %568 = vmatprep.subr.bf16.mxu0 0
    %569 = vmatpush1.bf16.msra.mxu0 %v511
    %570 = vmatprep.subr.bf16.mxu0 0
    %571 = vmatpush1.bf16.msra.mxu0 %v512
    %572 = vmatprep.subr.bf16.mxu0 0
    %573 = vmatpush1.bf16.msra.mxu0 %v513
    %574 = vmatprep.subr.bf16.mxu0 0
    %575 = vmatpush1.bf16.msra.mxu0 %v514
    %576 = vmatprep.subr.bf16.mxu0 0
    %577 = vmatpush1.bf16.msra.mxu0 %v515
    %578 = vmatprep.subr.bf16.mxu0 0
    %579 = vmatpush1.bf16.msra.mxu0 %v516
    %580 = vmatprep.subr.bf16.mxu0 0
    %581 = vmatpush1.bf16.msra.mxu0 %v517
    %582 = vmatprep.subr.bf16.mxu0 0
    %583 = vmatpush1.bf16.msra.mxu0 0
    %584 = vmatprep.subr.bf16.mxu0 0
    %585 = vmatpush1.bf16.msra.mxu0 0
    %586 = vmatprep.subr.bf16.mxu0 0
    %587 = vmatpush1.bf16.msra.mxu0 0
    %588 = vmatprep.subr.bf16.mxu0 0
    %589 = vmatpush1.bf16.msra.mxu0 0
    %590 = vmatprep.subr.bf16.mxu0 0
    %591 = vmatpush1.bf16.msra.mxu0 0
    %592 = vmatprep.subr.bf16.mxu0 0
    %593 = vmatpush1.bf16.msra.mxu0 0
    %594 = vmatprep.subr.bf16.mxu0 0
    %595 = vmatpush1.bf16.msra.mxu0 0
    %596 = vmatprep.subr.bf16.mxu0 0
    %597 = vmatpush1.bf16.msra.mxu0 0
    %598 = vmatprep.mubr.bf16.mxu0 0
    %599 = vmatmul.mubr.bf16.gmra.mrb[0].mxu0 %v550
    %v600 = vpop.f32.mrb[0].mxu0
    %v601 = vadd.f32 0.0, %v600
    %v602 = vpop.f32.mrb[0].mxu0
    %v603 = vpop.f32.mrb[0].mxu0
    %v604 = vadd.f32 0.0, %v603
    %v605 = vpop.f32.mrb[0].mxu0
    %606 = vmatprep.mubr.bf16.mxu0 0
    %607 = vmatmul.mubr.bf16.gmra.mrb[0].mxu0 %v551
    %v608 = vpop.f32.mrb[0].mxu0
    %v609 = vadd.f32 0.0, %v608
    %v610 = vpop.f32.mrb[0].mxu0
    %v611 = vpop.f32.mrb[0].mxu0
    %v612 = vadd.f32 0.0, %v611
    %v613 = vpop.f32.mrb[0].mxu0
    %614 = vmatprep.mubr.bf16.mxu0 0
    %615 = vmatmul.mubr.bf16.gmra.mrb[0].mxu0 %v552
    %v616 = vpop.f32.mrb[0].mxu0
    %v617 = vadd.f32 0.0, %v616
    %v618 = vpop.f32.mrb[0].mxu0
    %v619 = vpop.f32.mrb[0].mxu0
    %v620 = vadd.f32 0.0, %v619
    %v621 = vpop.f32.mrb[0].mxu0
    %622 = vmatprep.mubr.bf16.mxu0 0
    %623 = vmatmul.mubr.bf16.gmra.mrb[0].mxu0 %v553
    %v624 = vpop.f32.mrb[0].mxu0
    %v625 = vadd.f32 0.0, %v624
    %v626 = vpop.f32.mrb[0].mxu0
    %v627 = vpop.f32.mrb[0].mxu0
    %v628 = vadd.f32 0.0, %v627
    %v629 = vpop.f32.mrb[0].mxu0
    %630 = vmatprep.mubr.bf16.mxu0 0
    %631 = vmatmul.mubr.bf16.gmra.mrb[0].mxu0 %v554
    %v632 = vpop.f32.mrb[0].mxu0
    %v633 = vadd.f32 0.0, %v632
    %v634 = vpop.f32.mrb[0].mxu0
    %v635 = vpop.f32.mrb[0].mxu0
    %v636 = vadd.f32 0.0, %v635
    %v637 = vpop.f32.mrb[0].mxu0
    %638 = vmatprep.mubr.bf16.mxu0 0
    %639 = vmatmul.mubr.bf16.gmra.mrb[0].mxu0 %v555
    %v640 = vpop.f32.mrb[0].mxu0
    %v641 = vadd.f32 0.0, %v640
    %v642 = vpop.f32.mrb[0].mxu0
    %v643 = vpop.f32.mrb[0].mxu0
    %v644 = vadd.f32 0.0, %v643
    %v645 = vpop.f32.mrb[0].mxu0
    %646 = vmatprep.mubr.bf16.mxu0 0
    %647 = vmatmul.mubr.bf16.gmra.mrb[0].mxu0 %v556
    %v648 = vpop.f32.mrb[0].mxu0
    %v649 = vadd.f32 0.0, %v648
    %v650 = vpop.f32.mrb[0].mxu0
    %v651 = vpop.f32.mrb[0].mxu0
    %v652 = vadd.f32 0.0, %v651
    %v653 = vpop.f32.mrb[0].mxu0
    %654 = vmatprep.mubr.bf16.mxu0 0
    %655 = vmatmul.mubr.bf16.gmra.mrb[0].mxu0 %v557
    %v656 = vpop.f32.mrb[0].mxu0
    %v657 = vadd.f32 0.0, %v656
    %v658 = vpop.f32.mrb[0].mxu0
    %v659 = vpop.f32.mrb[0].mxu0
    %v660 = vadd.f32 0.0, %v659
    %v661 = vpop.f32.mrb[0].mxu0
    %662 = vdwg.mxu0
    %v663 = vmul.f32 %v417, %v601
    %v664 = vmul.f32 %v422, %v604
    %v665 = vmul.f32 %v427, %v609
    %v666 = vmul.f32 %v432, %v612
    %v667 = vmul.f32 %v437, %v617
    %v668 = vmul.f32 %v442, %v620
    %v669 = vmul.f32 %v447, %v625
    %v670 = vmul.f32 %v452, %v628
    %v671 = vmul.f32 %v457, %v633
    %v672 = vmul.f32 %v462, %v636
    %v673 = vmul.f32 %v467, %v641
    %v674 = vmul.f32 %v472, %v644
    %v675 = vmul.f32 %v477, %v649
    %v676 = vmul.f32 %v482, %v652
    %v677 = vmul.f32 %v487, %v657
    %v678 = vmul.f32 %v492, %v660
    %v679 = vld [vmem:[#allocation10] sm:$0x1]
    %v681 = vlaneseq
    %v682 = vshrl.u32 %v681, 7
    %v683 = vsub.s32 0, %v682
    %v684 = vrot.slane %v679, %v683
    %v686 = vadd.f32 %v663, %v684
    %v687 = vadd.f32 %v664, %v684
    %v688 = vadd.f32 %v665, %v684
    %v689 = vadd.f32 %v666, %v684
    %v690 = vadd.f32 %v667, %v684
    %v691 = vadd.f32 %v668, %v684
    %v692 = vadd.f32 %v669, %v684
    %v693 = vadd.f32 %v670, %v684
    %v694 = vadd.f32 %v671, %v684
    %v695 = vadd.f32 %v672, %v684
    %v696 = vadd.f32 %v673, %v684
    %v697 = vadd.f32 %v674, %v684
    %v698 = vadd.f32 %v675, %v684
    %v699 = vadd.f32 %v676, %v684
    %v700 = vadd.f32 %v677, %v684
    %v701 = vadd.f32 %v678, %v684
    %v702 = vmax.f32 %v686, 0.0
    %v703 = vmax.f32 %v687, 0.0
    %v704 = vmax.f32 %v688, 0.0
    %v705 = vmax.f32 %v689, 0.0
    %v706 = vmax.f32 %v690, 0.0
    %v707 = vmax.f32 %v691, 0.0
    %v708 = vmax.f32 %v692, 0.0
    %v709 = vmax.f32 %v693, 0.0
    %v710 = vmax.f32 %v694, 0.0
    %v711 = vmax.f32 %v695, 0.0
    %v712 = vmax.f32 %v696, 0.0
    %v713 = vmax.f32 %v697, 0.0
    %v714 = vmax.f32 %v698, 0.0
    %v715 = vmax.f32 %v699, 0.0
    %v716 = vmax.f32 %v700, 0.0
    %v717 = vmax.f32 %v701, 0.0
    %v718 = vld [vmem:[#allocation11] sm:$0xf]
    %v719 = vld [vmem:[#allocation11 + $0x4] sm:$0xf]
    %v720 = vld [vmem:[#allocation11 + $0x8] sm:$0xf]
    %v721 = vld [vmem:[#allocation11 + $0xc] sm:$0xf]
    %v722 = vld [vmem:[#allocation11 + $0x10] sm:$0xf]
    %v723 = vld [vmem:[#allocation11 + $0x14] sm:$0xf]
    %v724 = vld [vmem:[#allocation11 + $0x18] sm:$0xf]
    %v725 = vld [vmem:[#allocation11 + $0x1c] sm:$0xf]
    %v726 = vld [vmem:[#allocation11 + $0x20] sm:$0xf]
    %v727 = vld [vmem:[#allocation11 + $0x24] sm:$0xf]
    %v728 = vld [vmem:[#allocation11 + $0x28] sm:$0xf]
    %v729 = vld [vmem:[#allocation11 + $0x2c] sm:$0xf]
    %v730 = vld [vmem:[#allocation11 + $0x30] sm:$0xf]
    %v731 = vld [vmem:[#allocation11 + $0x34] sm:$0xf]
    %v732 = vld [vmem:[#allocation11 + $0x38] sm:$0xf]
    %v733 = vld [vmem:[#allocation11 + $0x3c] sm:$0xf]
    %v734 = vld [vmem:[#allocation13] sm:$0x1]
    %v735 = vld [vmem:[#allocation14] sm:$0x1]
    %v736 = vld [vmem:[#allocation16] sm:$0x1]
    %v737 = vpack.c.bf16 %v703, %v702
    %v738 = vpack.c.bf16 %v705, %v704
    %v739 = vpack.c.bf16 %v707, %v706
    %v740 = vpack.c.bf16 %v709, %v708
    %v741 = vpack.c.bf16 %v711, %v710
    %v742 = vpack.c.bf16 %v713, %v712
    %v743 = vpack.c.bf16 %v715, %v714
    %v744 = vpack.c.bf16 %v717, %v716
    %v761 = vunpack.c.l.b16 %v718
    %v762 = vunpack.c.l.b16 %v719
    %v763 = vunpack.c.l.b16 %v720
    %v764 = vunpack.c.l.b16 %v721
    %v765 = vunpack.c.l.b16 %v722
    %v766 = vunpack.c.l.b16 %v723
    %v767 = vunpack.c.l.b16 %v724
    %v768 = vunpack.c.l.b16 %v725
    %v769 = vunpack.c.l.b16 %v726
    %v770 = vunpack.c.l.b16 %v727
    %v771 = vunpack.c.l.b16 %v728
    %v772 = vunpack.c.l.b16 %v729
    %v773 = vunpack.c.l.b16 %v730
    %v774 = vunpack.c.l.b16 %v731
    %v775 = vunpack.c.l.b16 %v732
    %v776 = vunpack.c.l.b16 %v733
    %v777 = vpack.c.b16 %v762, %v761
    %v778 = vpack.c.b16 %v764, %v763
    %v779 = vpack.c.b16 %v766, %v765
    %v780 = vpack.c.b16 %v768, %v767
    %v781 = vpack.c.b16 %v770, %v769
    %v782 = vpack.c.b16 %v772, %v771
    %v783 = vpack.c.b16 %v774, %v773
    %v784 = vpack.c.b16 %v776, %v775
    %793 = vmatprep.subr.bf16.mxu0 0
    %794 = vmatpush1.bf16.msra.mxu0 %v777
    %795 = vmatprep.subr.bf16.mxu0 0
    %796 = vmatpush1.bf16.msra.mxu0 %v778
    %797 = vmatprep.subr.bf16.mxu0 0
    %798 = vmatpush1.bf16.msra.mxu0 %v779
    %799 = vmatprep.subr.bf16.mxu0 0
    %800 = vmatpush1.bf16.msra.mxu0 %v780
    %801 = vmatprep.subr.bf16.mxu0 0
    %802 = vmatpush1.bf16.msra.mxu0 %v781
    %803 = vmatprep.subr.bf16.mxu0 0
    %804 = vmatpush1.bf16.msra.mxu0 %v782
    %805 = vmatprep.subr.bf16.mxu0 0
    %806 = vmatpush1.bf16.msra.mxu0 %v783
    %807 = vmatprep.subr.bf16.mxu0 0
    %808 = vmatpush1.bf16.msra.mxu0 %v784
    %809 = vmatprep.subr.bf16.mxu0 0
    %810 = vmatpush1.bf16.msra.mxu0 0
    %811 = vmatprep.subr.bf16.mxu0 0
    %812 = vmatpush1.bf16.msra.mxu0 0
    %813 = vmatprep.subr.bf16.mxu0 0
    %814 = vmatpush1.bf16.msra.mxu0 0
    %815 = vmatprep.subr.bf16.mxu0 0
    %816 = vmatpush1.bf16.msra.mxu0 0
    %817 = vmatprep.subr.bf16.mxu0 0
    %818 = vmatpush1.bf16.msra.mxu0 0
    %819 = vmatprep.subr.bf16.mxu0 0
    %820 = vmatpush1.bf16.msra.mxu0 0
    %821 = vmatprep.subr.bf16.mxu0 0
    %822 = vmatpush1.bf16.msra.mxu0 0
    %823 = vmatprep.subr.bf16.mxu0 0
    %824 = vmatpush1.bf16.msra.mxu0 0
    %825 = vmatprep.mubr.bf16.mxu0 0
    %826 = vmatmul.mubr.bf16.gmra.mrb[0].mxu0 %v737
    %v827 = vpop.f32.mrb[0].mxu0
    %v828 = vadd.f32 0.0, %v827
    %v829 = vpop.f32.mrb[0].mxu0
    %v830 = vpop.f32.mrb[0].mxu0
    %v831 = vadd.f32 0.0, %v830
    %v832 = vpop.f32.mrb[0].mxu0
    %833 = vmatprep.mubr.bf16.mxu0 0
    %834 = vmatmul.mubr.bf16.gmra.mrb[0].mxu0 %v738
    %v835 = vpop.f32.mrb[0].mxu0
    %v836 = vadd.f32 0.0, %v835
    %v837 = vpop.f32.mrb[0].mxu0
    %v838 = vpop.f32.mrb[0].mxu0
    %v839 = vadd.f32 0.0, %v838
    %v840 = vpop.f32.mrb[0].mxu0
    %841 = vmatprep.mubr.bf16.mxu0 0
    %842 = vmatmul.mubr.bf16.gmra.mrb[0].mxu0 %v739
    %v843 = vpop.f32.mrb[0].mxu0
    %v844 = vadd.f32 0.0, %v843
    %v845 = vpop.f32.mrb[0].mxu0
    %v846 = vpop.f32.mrb[0].mxu0
    %v847 = vadd.f32 0.0, %v846
    %v848 = vpop.f32.mrb[0].mxu0
    %849 = vmatprep.mubr.bf16.mxu0 0
    %850 = vmatmul.mubr.bf16.gmra.mrb[0].mxu0 %v740
    %v851 = vpop.f32.mrb[0].mxu0
    %v852 = vadd.f32 0.0, %v851
    %v853 = vpop.f32.mrb[0].mxu0
    %v854 = vpop.f32.mrb[0].mxu0
    %v855 = vadd.f32 0.0, %v854
    %v856 = vpop.f32.mrb[0].mxu0
    %857 = vmatprep.mubr.bf16.mxu0 0
    %858 = vmatmul.mubr.bf16.gmra.mrb[0].mxu0 %v741
    %v859 = vpop.f32.mrb[0].mxu0
    %v860 = vadd.f32 0.0, %v859
    %v861 = vpop.f32.mrb[0].mxu0
    %v862 = vpop.f32.mrb[0].mxu0
    %v863 = vadd.f32 0.0, %v862
    %v864 = vpop.f32.mrb[0].mxu0
    %865 = vmatprep.mubr.bf16.mxu0 0
    %866 = vmatmul.mubr.bf16.gmra.mrb[0].mxu0 %v742
    %v867 = vpop.f32.mrb[0].mxu0
    %v868 = vadd.f32 0.0, %v867
    %v869 = vpop.f32.mrb[0].mxu0
    %v870 = vpop.f32.mrb[0].mxu0
    %v871 = vadd.f32 0.0, %v870
    %v872 = vpop.f32.mrb[0].mxu0
    %873 = vmatprep.mubr.bf16.mxu0 0
    %874 = vmatmul.mubr.bf16.gmra.mrb[0].mxu0 %v743
    %v875 = vpop.f32.mrb[0].mxu0
    %v876 = vadd.f32 0.0, %v875
    %v877 = vpop.f32.mrb[0].mxu0
    %v878 = vpop.f32.mrb[0].mxu0
    %v879 = vadd.f32 0.0, %v878
    %v880 = vpop.f32.mrb[0].mxu0
    %881 = vmatprep.mubr.bf16.mxu0 0
    %882 = vmatmul.mubr.bf16.gmra.mrb[0].mxu0 %v744
    %v883 = vpop.f32.mrb[0].mxu0
    %v884 = vadd.f32 0.0, %v883
    %v885 = vpop.f32.mrb[0].mxu0
    %v886 = vpop.f32.mrb[0].mxu0
    %v887 = vadd.f32 0.0, %v886
    %v888 = vpop.f32.mrb[0].mxu0
    %889 = vdwg.mxu0
    %v891 = vlaneseq
    %v892 = vshrl.u32 %v891, 7
    %v893 = vsub.s32 0, %v892
    %v894 = vrot.slane %v734, %v893
    %v896 = vmul.f32 %v828, %v894
    %v897 = vmul.f32 %v831, %v894
    %v898 = vmul.f32 %v836, %v894
    %v899 = vmul.f32 %v839, %v894
    %v900 = vmul.f32 %v844, %v894
    %v901 = vmul.f32 %v847, %v894
    %v902 = vmul.f32 %v852, %v894
    %v903 = vmul.f32 %v855, %v894
    %v904 = vmul.f32 %v860, %v894
    %v905 = vmul.f32 %v863, %v894
    %v906 = vmul.f32 %v868, %v894
    %v907 = vmul.f32 %v871, %v894
    %v908 = vmul.f32 %v876, %v894
    %v909 = vmul.f32 %v879, %v894
    %v910 = vmul.f32 %v884, %v894
    %v911 = vmul.f32 %v887, %v894
    %912 = vadd.xlane.f32.xlu0 %v896
    %v913 = vpop.xlane.xlu0 %912
    %914 = vadd.xlane.f32.xlu0 %v897
    %v915 = vpop.xlane.xlu0 %914
    %916 = vadd.xlane.f32.xlu0 %v898
    %v917 = vpop.xlane.xlu0 %916
    %918 = vadd.xlane.f32.xlu0 %v899
    %v919 = vpop.xlane.xlu0 %918
    %920 = vadd.xlane.f32.xlu0 %v900
    %v921 = vpop.xlane.xlu0 %920
    %922 = vadd.xlane.f32.xlu0 %v901
    %v923 = vpop.xlane.xlu0 %922
    %924 = vadd.xlane.f32.xlu0 %v902
    %v925 = vpop.xlane.xlu0 %924
    %926 = vadd.xlane.f32.xlu0 %v903
    %v927 = vpop.xlane.xlu0 %926
    %928 = vadd.xlane.f32.xlu0 %v904
    %v929 = vpop.xlane.xlu0 %928
    %930 = vadd.xlane.f32.xlu0 %v905
    %v931 = vpop.xlane.xlu0 %930
    %932 = vadd.xlane.f32.xlu0 %v906
    %v933 = vpop.xlane.xlu0 %932
    %934 = vadd.xlane.f32.xlu0 %v907
    %v935 = vpop.xlane.xlu0 %934
    %936 = vadd.xlane.f32.xlu0 %v908
    %v937 = vpop.xlane.xlu0 %936
    %938 = vadd.xlane.f32.xlu0 %v909
    %v939 = vpop.xlane.xlu0 %938
    %940 = vadd.xlane.f32.xlu0 %v910
    %v941 = vpop.xlane.xlu0 %940
    %942 = vadd.xlane.f32.xlu0 %v911
    %v943 = vpop.xlane.xlu0 %942
    %v945 = vlaneseq
    %v946 = vshrl.u32 %v945, 7
    %v947 = vsub.s32 0, %v946
    %v948 = vrot.slane %v735, %v947
    %v950 = vmul.f32 %v828, %v948
    %v951 = vmul.f32 %v831, %v948
    %v952 = vmul.f32 %v836, %v948
    %v953 = vmul.f32 %v839, %v948
    %v954 = vmul.f32 %v844, %v948
    %v955 = vmul.f32 %v847, %v948
    %v956 = vmul.f32 %v852, %v948
    %v957 = vmul.f32 %v855, %v948
    %v958 = vmul.f32 %v860, %v948
    %v959 = vmul.f32 %v863, %v948
    %v960 = vmul.f32 %v868, %v948
    %v961 = vmul.f32 %v871, %v948
    %v962 = vmul.f32 %v876, %v948
    %v963 = vmul.f32 %v879, %v948
    %v964 = vmul.f32 %v884, %v948
    %v965 = vmul.f32 %v887, %v948
    %966 = vadd.xlane.f32.xlu0 %v950
    %v967 = vpop.xlane.xlu0 %966
    %968 = vadd.xlane.f32.xlu0 %v951
    %v969 = vpop.xlane.xlu0 %968
    %970 = vadd.xlane.f32.xlu0 %v952
    %v971 = vpop.xlane.xlu0 %970
    %972 = vadd.xlane.f32.xlu0 %v953
    %v973 = vpop.xlane.xlu0 %972
    %974 = vadd.xlane.f32.xlu0 %v954
    %v975 = vpop.xlane.xlu0 %974
    %976 = vadd.xlane.f32.xlu0 %v955
    %v977 = vpop.xlane.xlu0 %976
    %978 = vadd.xlane.f32.xlu0 %v956
    %v979 = vpop.xlane.xlu0 %978
    %980 = vadd.xlane.f32.xlu0 %v957
    %v981 = vpop.xlane.xlu0 %980
    %982 = vadd.xlane.f32.xlu0 %v958
    %v983 = vpop.xlane.xlu0 %982
    %984 = vadd.xlane.f32.xlu0 %v959
    %v985 = vpop.xlane.xlu0 %984
    %986 = vadd.xlane.f32.xlu0 %v960
    %v987 = vpop.xlane.xlu0 %986
    %988 = vadd.xlane.f32.xlu0 %v961
    %v989 = vpop.xlane.xlu0 %988
    %990 = vadd.xlane.f32.xlu0 %v962
    %v991 = vpop.xlane.xlu0 %990
    %992 = vadd.xlane.f32.xlu0 %v963
    %v993 = vpop.xlane.xlu0 %992
    %994 = vadd.xlane.f32.xlu0 %v964
    %v995 = vpop.xlane.xlu0 %994
    %996 = vadd.xlane.f32.xlu0 %v965
    %v997 = vpop.xlane.xlu0 %996
    %998 = vxpose.xlu0.b32.start [1/16] %v913, 128
    %999 = vxpose.xlu0.b32.cont [2/16] %v915, 128
    %1000 = vxpose.xlu0.b32.cont [3/16] %v917, 128
    %1001 = vxpose.xlu0.b32.cont [4/16] %v919, 128
    %1002 = vxpose.xlu0.b32.cont [5/16] %v921, 128
    %1003 = vxpose.xlu0.b32.cont [6/16] %v923, 128
    %1004 = vxpose.xlu0.b32.cont [7/16] %v925, 128
    %1005 = vxpose.xlu0.b32.cont [8/16] %v927, 128
    %1006 = vxpose.xlu0.b32.cont [9/16] %v929, 128
    %1007 = vxpose.xlu0.b32.cont [10/16] %v931, 128
    %1008 = vxpose.xlu0.b32.cont [11/16] %v933, 128
    %1009 = vxpose.xlu0.b32.cont [12/16] %v935, 128
    %1010 = vxpose.xlu0.b32.cont [13/16] %v937, 128
    %1011 = vxpose.xlu0.b32.cont [14/16] %v939, 128
    %1012 = vxpose.xlu0.b32.cont [15/16] %v941, 128
    %1013 = vxpose.xlu0.b32.end [16/16] %v943, 128
    %v1014 = vpop.trf.xlu0
    %v1015 = vpop.trf.xlu0
    %v1016 = vpop.trf.xlu0
    %v1017 = vpop.trf.xlu0
    %v1018 = vpop.trf.xlu0
    %v1019 = vpop.trf.xlu0
    %v1020 = vpop.trf.xlu0
    %v1021 = vpop.trf.xlu0
    %v1022 = vpop.trf.xlu0
    %v1023 = vpop.trf.xlu0
    %v1024 = vpop.trf.xlu0
    %v1025 = vpop.trf.xlu0
    %v1026 = vpop.trf.xlu0
    %v1027 = vpop.trf.xlu0
    %v1028 = vpop.trf.xlu0
    %v1029 = vpop.trf.xlu0
    %v1030 = vlaneseq
    %v1031 = vshrl.u32 %v1030, 7
    %v1032 = vsub.s32 0, %v1031
    %v1033 = vrot.slane %v1014, %v1032
    %v1034 = vadd.f32 %v967, %v1033
    %v1035 = vadd.f32 %v969, %v1033
    %v1036 = vadd.f32 %v971, %v1033
    %v1037 = vadd.f32 %v973, %v1033
    %v1038 = vadd.f32 %v975, %v1033
    %v1039 = vadd.f32 %v977, %v1033
    %v1040 = vadd.f32 %v979, %v1033
    %v1041 = vadd.f32 %v981, %v1033
    %v1042 = vadd.f32 %v983, %v1033
    %v1043 = vadd.f32 %v985, %v1033
    %v1044 = vadd.f32 %v987, %v1033
    %v1045 = vadd.f32 %v989, %v1033
    %v1046 = vadd.f32 %v991, %v1033
    %v1047 = vadd.f32 %v993, %v1033
    %v1048 = vadd.f32 %v995, %v1033
    %v1049 = vadd.f32 %v997, %v1033
    %vm1050 = vcmp.gt.f32.partialorder %v1034, 0.0
    %vm1051 = vcmp.gt.f32.partialorder %v1035, 0.0
    %vm1052 = vcmp.gt.f32.partialorder %v1036, 0.0
    %vm1053 = vcmp.gt.f32.partialorder %v1037, 0.0
    %vm1054 = vcmp.gt.f32.partialorder %v1038, 0.0
    %vm1055 = vcmp.gt.f32.partialorder %v1039, 0.0
    %vm1056 = vcmp.gt.f32.partialorder %v1040, 0.0
    %vm1057 = vcmp.gt.f32.partialorder %v1041, 0.0
    %vm1058 = vcmp.gt.f32.partialorder %v1042, 0.0
    %vm1059 = vcmp.gt.f32.partialorder %v1043, 0.0
    %vm1060 = vcmp.gt.f32.partialorder %v1044, 0.0
    %vm1061 = vcmp.gt.f32.partialorder %v1045, 0.0
    %vm1062 = vcmp.gt.f32.partialorder %v1046, 0.0
    %vm1063 = vcmp.gt.f32.partialorder %v1047, 0.0
    %vm1064 = vcmp.gt.f32.partialorder %v1048, 0.0
    %vm1065 = vcmp.gt.f32.partialorder %v1049, 0.0
    %v1066 = vmul.f32 %v1034, 0.2
    %v1067 = vmul.f32 %v1035, 0.2
    %v1068 = vmul.f32 %v1036, 0.2
    %v1069 = vmul.f32 %v1037, 0.2
    %v1070 = vmul.f32 %v1038, 0.2
    %v1071 = vmul.f32 %v1039, 0.2
    %v1072 = vmul.f32 %v1040, 0.2
    %v1073 = vmul.f32 %v1041, 0.2
    %v1074 = vmul.f32 %v1042, 0.2
    %v1075 = vmul.f32 %v1043, 0.2
    %v1076 = vmul.f32 %v1044, 0.2
    %v1077 = vmul.f32 %v1045, 0.2
    %v1078 = vmul.f32 %v1046, 0.2
    %v1079 = vmul.f32 %v1047, 0.2
    %v1080 = vmul.f32 %v1048, 0.2
    %v1081 = vmul.f32 %v1049, 0.2
    %v1082 = vsel %vm1050, %v1034, %v1066
    %v1083 = vsel %vm1051, %v1035, %v1067
    %v1084 = vsel %vm1052, %v1036, %v1068
    %v1085 = vsel %vm1053, %v1037, %v1069
    %v1086 = vsel %vm1054, %v1038, %v1070
    %v1087 = vsel %vm1055, %v1039, %v1071
    %v1088 = vsel %vm1056, %v1040, %v1072
    %v1089 = vsel %vm1057, %v1041, %v1073
    %v1090 = vsel %vm1058, %v1042, %v1074
    %v1091 = vsel %vm1059, %v1043, %v1075
    %v1092 = vsel %vm1060, %v1044, %v1076
    %v1093 = vsel %vm1061, %v1045, %v1077
    %v1094 = vsel %vm1062, %v1046, %v1078
    %v1095 = vsel %vm1063, %v1047, %v1079
    %v1096 = vsel %vm1064, %v1048, %v1080
    %v1097 = vsel %vm1065, %v1049, %v1081
    %v1098 = vsel %vm197, 65537, 0
    %v1099 = vsel %vm198, 65537, 0
    %v1100 = vsel %vm199, 65537, 0
    %v1101 = vsel %vm200, 65537, 0
    %v1102 = vsel %vm201, 65537, 0
    %v1103 = vsel %vm202, 65537, 0
    %v1104 = vsel %vm203, 65537, 0
    %v1105 = vsel %vm204, 65537, 0
    %v1106 = vsel %vm205, 65537, 0
    %v1107 = vsel %vm206, 65537, 0
    %v1108 = vsel %vm207, 65537, 0
    %v1109 = vsel %vm208, 65537, 0
    %v1110 = vsel %vm209, 65537, 0
    %v1111 = vsel %vm210, 65537, 0
    %v1112 = vsel %vm211, 65537, 0
    %v1113 = vsel %vm212, 65537, 0
    %v1114 = vunpack.c.l.b16 %v1098
    %v1115 = vunpack.c.l.b16 %v1099
    %v1116 = vunpack.c.l.b16 %v1100
    %v1117 = vunpack.c.l.b16 %v1101
    %v1118 = vunpack.c.l.b16 %v1102
    %v1119 = vunpack.c.l.b16 %v1103
    %v1120 = vunpack.c.l.b16 %v1104
    %v1121 = vunpack.c.l.b16 %v1105
    %v1122 = vunpack.c.l.b16 %v1106
    %v1123 = vunpack.c.l.b16 %v1107
    %v1124 = vunpack.c.l.b16 %v1108
    %v1125 = vunpack.c.l.b16 %v1109
    %v1126 = vunpack.c.l.b16 %v1110
    %v1127 = vunpack.c.l.b16 %v1111
    %v1128 = vunpack.c.l.b16 %v1112
    %v1129 = vunpack.c.l.b16 %v1113
    %vm1130 = vcmp.ne.s32.totalorder %v1114, 0
    %vm1131 = vcmp.ne.s32.totalorder %v1115, 0
    %vm1132 = vcmp.ne.s32.totalorder %v1116, 0
    %vm1133 = vcmp.ne.s32.totalorder %v1117, 0
    %vm1134 = vcmp.ne.s32.totalorder %v1118, 0
    %vm1135 = vcmp.ne.s32.totalorder %v1119, 0
    %vm1136 = vcmp.ne.s32.totalorder %v1120, 0
    %vm1137 = vcmp.ne.s32.totalorder %v1121, 0
    %vm1138 = vcmp.ne.s32.totalorder %v1122, 0
    %vm1139 = vcmp.ne.s32.totalorder %v1123, 0
    %vm1140 = vcmp.ne.s32.totalorder %v1124, 0
    %vm1141 = vcmp.ne.s32.totalorder %v1125, 0
    %vm1142 = vcmp.ne.s32.totalorder %v1126, 0
    %vm1143 = vcmp.ne.s32.totalorder %v1127, 0
    %vm1144 = vcmp.ne.s32.totalorder %v1128, 0
    %vm1145 = vcmp.ne.s32.totalorder %v1129, 0
    %v1146 = vsel %vm1130, %v1082, -1e+30
    %v1147 = vsel %vm1131, %v1083, -1e+30
    %v1148 = vsel %vm1132, %v1084, -1e+30
    %v1149 = vsel %vm1133, %v1085, -1e+30
    %v1150 = vsel %vm1134, %v1086, -1e+30
    %v1151 = vsel %vm1135, %v1087, -1e+30
    %v1152 = vsel %vm1136, %v1088, -1e+30
    %v1153 = vsel %vm1137, %v1089, -1e+30
    %v1154 = vsel %vm1138, %v1090, -1e+30
    %v1155 = vsel %vm1139, %v1091, -1e+30
    %v1156 = vsel %vm1140, %v1092, -1e+30
    %v1157 = vsel %vm1141, %v1093, -1e+30
    %v1158 = vsel %vm1142, %v1094, -1e+30
    %v1159 = vsel %vm1143, %v1095, -1e+30
    %v1160 = vsel %vm1144, %v1096, -1e+30
    %v1161 = vsel %vm1145, %v1097, -1e+30
    %1162 = vmax.xlane.f32.xlu0 %v1146
    %v1163 = vpop.xlane.xlu0 %1162
    %1164 = vmax.xlane.f32.xlu0 %v1147
    %v1165 = vpop.xlane.xlu0 %1164
    %1166 = vmax.xlane.f32.xlu0 %v1148
    %v1167 = vpop.xlane.xlu0 %1166
    %1168 = vmax.xlane.f32.xlu0 %v1149
    %v1169 = vpop.xlane.xlu0 %1168
    %1170 = vmax.xlane.f32.xlu0 %v1150
    %v1171 = vpop.xlane.xlu0 %1170
    %1172 = vmax.xlane.f32.xlu0 %v1151
    %v1173 = vpop.xlane.xlu0 %1172
    %1174 = vmax.xlane.f32.xlu0 %v1152
    %v1175 = vpop.xlane.xlu0 %1174
    %1176 = vmax.xlane.f32.xlu0 %v1153
    %v1177 = vpop.xlane.xlu0 %1176
    %1178 = vmax.xlane.f32.xlu0 %v1154
    %v1179 = vpop.xlane.xlu0 %1178
    %1180 = vmax.xlane.f32.xlu0 %v1155
    %v1181 = vpop.xlane.xlu0 %1180
    %1182 = vmax.xlane.f32.xlu0 %v1156
    %v1183 = vpop.xlane.xlu0 %1182
    %1184 = vmax.xlane.f32.xlu0 %v1157
    %v1185 = vpop.xlane.xlu0 %1184
    %1186 = vmax.xlane.f32.xlu0 %v1158
    %v1187 = vpop.xlane.xlu0 %1186
    %1188 = vmax.xlane.f32.xlu0 %v1159
    %v1189 = vpop.xlane.xlu0 %1188
    %1190 = vmax.xlane.f32.xlu0 %v1160
    %v1191 = vpop.xlane.xlu0 %1190
    %1192 = vmax.xlane.f32.xlu0 %v1161
    %v1193 = vpop.xlane.xlu0 %1192
    %v1194 = vsub.f32 %v1146, %v1163
    %v1195 = vsub.f32 %v1147, %v1165
    %v1196 = vsub.f32 %v1148, %v1167
    %v1197 = vsub.f32 %v1149, %v1169
    %v1198 = vsub.f32 %v1150, %v1171
    %v1199 = vsub.f32 %v1151, %v1173
    %v1200 = vsub.f32 %v1152, %v1175
    %v1201 = vsub.f32 %v1153, %v1177
    %v1202 = vsub.f32 %v1154, %v1179
    %v1203 = vsub.f32 %v1155, %v1181
    %v1204 = vsub.f32 %v1156, %v1183
    %v1205 = vsub.f32 %v1157, %v1185
    %v1206 = vsub.f32 %v1158, %v1187
    %v1207 = vsub.f32 %v1159, %v1189
    %v1208 = vsub.f32 %v1160, %v1191
    %v1209 = vsub.f32 %v1161, %v1193
    %v1210 = vmul.f32 %v1194, 1.442695
    %v1211 = vpow.pop %v1210
    %v1212 = vmul.f32 %v1195, 1.442695
    %v1213 = vpow.pop %v1212
    %v1214 = vmul.f32 %v1196, 1.442695
    %v1215 = vpow.pop %v1214
    %v1216 = vmul.f32 %v1197, 1.442695
    %v1217 = vpow.pop %v1216
    %v1218 = vmul.f32 %v1198, 1.442695
    %v1219 = vpow.pop %v1218
    %v1220 = vmul.f32 %v1199, 1.442695
    %v1221 = vpow.pop %v1220
    %v1222 = vmul.f32 %v1200, 1.442695
    %v1223 = vpow.pop %v1222
    %v1224 = vmul.f32 %v1201, 1.442695
    %v1225 = vpow.pop %v1224
    %v1226 = vmul.f32 %v1202, 1.442695
    %v1227 = vpow.pop %v1226
    %v1228 = vmul.f32 %v1203, 1.442695
    %v1229 = vpow.pop %v1228
    %v1230 = vmul.f32 %v1204, 1.442695
    %v1231 = vpow.pop %v1230
    %v1232 = vmul.f32 %v1205, 1.442695
    %v1233 = vpow.pop %v1232
    %v1234 = vmul.f32 %v1206, 1.442695
    %v1235 = vpow.pop %v1234
    %v1236 = vmul.f32 %v1207, 1.442695
    %v1237 = vpow.pop %v1236
    %v1238 = vmul.f32 %v1208, 1.442695
    %v1239 = vpow.pop %v1238
    %v1240 = vmul.f32 %v1209, 1.442695
    %v1241 = vpow.pop %v1240
    %v1242 = vsel %vm1130, %v1211, 0.0
    %v1243 = vsel %vm1131, %v1213, 0.0
    %v1244 = vsel %vm1132, %v1215, 0.0
    %v1245 = vsel %vm1133, %v1217, 0.0
    %v1246 = vsel %vm1134, %v1219, 0.0
    %v1247 = vsel %vm1135, %v1221, 0.0
    %v1248 = vsel %vm1136, %v1223, 0.0
    %v1249 = vsel %vm1137, %v1225, 0.0
    %v1250 = vsel %vm1138, %v1227, 0.0
    %v1251 = vsel %vm1139, %v1229, 0.0
    %v1252 = vsel %vm1140, %v1231, 0.0
    %v1253 = vsel %vm1141, %v1233, 0.0
    %v1254 = vsel %vm1142, %v1235, 0.0
    %v1255 = vsel %vm1143, %v1237, 0.0
    %v1256 = vsel %vm1144, %v1239, 0.0
    %v1257 = vsel %vm1145, %v1241, 0.0
    %1258 = vadd.xlane.f32.xlu0 %v1242
    %v1259 = vpop.xlane.xlu0 %1258
    %1260 = vadd.xlane.f32.xlu0 %v1243
    %v1261 = vpop.xlane.xlu0 %1260
    %1262 = vadd.xlane.f32.xlu0 %v1244
    %v1263 = vpop.xlane.xlu0 %1262
    %1264 = vadd.xlane.f32.xlu0 %v1245
    %v1265 = vpop.xlane.xlu0 %1264
    %1266 = vadd.xlane.f32.xlu0 %v1246
    %v1267 = vpop.xlane.xlu0 %1266
    %1268 = vadd.xlane.f32.xlu0 %v1247
    %v1269 = vpop.xlane.xlu0 %1268
    %1270 = vadd.xlane.f32.xlu0 %v1248
    %v1271 = vpop.xlane.xlu0 %1270
    %1272 = vadd.xlane.f32.xlu0 %v1249
    %v1273 = vpop.xlane.xlu0 %1272
    %1274 = vadd.xlane.f32.xlu0 %v1250
    %v1275 = vpop.xlane.xlu0 %1274
    %1276 = vadd.xlane.f32.xlu0 %v1251
    %v1277 = vpop.xlane.xlu0 %1276
    %1278 = vadd.xlane.f32.xlu0 %v1252
    %v1279 = vpop.xlane.xlu0 %1278
    %1280 = vadd.xlane.f32.xlu0 %v1253
    %v1281 = vpop.xlane.xlu0 %1280
    %1282 = vadd.xlane.f32.xlu0 %v1254
    %v1283 = vpop.xlane.xlu0 %1282
    %1284 = vadd.xlane.f32.xlu0 %v1255
    %v1285 = vpop.xlane.xlu0 %1284
    %1286 = vadd.xlane.f32.xlu0 %v1256
    %v1287 = vpop.xlane.xlu0 %1286
    %1288 = vadd.xlane.f32.xlu0 %v1257
    %v1289 = vpop.xlane.xlu0 %1288
    %v1290 = vrcp.pop %v1259
    %v1291 = vrcp.pop %v1261
    %v1292 = vrcp.pop %v1263
    %v1293 = vrcp.pop %v1265
    %v1294 = vrcp.pop %v1267
    %v1295 = vrcp.pop %v1269
    %v1296 = vrcp.pop %v1271
    %v1297 = vrcp.pop %v1273
    %v1298 = vrcp.pop %v1275
    %v1299 = vrcp.pop %v1277
    %v1300 = vrcp.pop %v1279
    %v1301 = vrcp.pop %v1281
    %v1302 = vrcp.pop %v1283
    %v1303 = vrcp.pop %v1285
    %v1304 = vrcp.pop %v1287
    %v1305 = vrcp.pop %v1289
    %v1306 = vmul.f32 %v1242, %v1290
    %v1307 = vmul.f32 %v1243, %v1291
    %v1308 = vmul.f32 %v1244, %v1292
    %v1309 = vmul.f32 %v1245, %v1293
    %v1310 = vmul.f32 %v1246, %v1294
    %v1311 = vmul.f32 %v1247, %v1295
    %v1312 = vmul.f32 %v1248, %v1296
    %v1313 = vmul.f32 %v1249, %v1297
    %v1314 = vmul.f32 %v1250, %v1298
    %v1315 = vmul.f32 %v1251, %v1299
    %v1316 = vmul.f32 %v1252, %v1300
    %v1317 = vmul.f32 %v1253, %v1301
    %v1318 = vmul.f32 %v1254, %v1302
    %v1319 = vmul.f32 %v1255, %v1303
    %v1320 = vmul.f32 %v1256, %v1304
    %v1321 = vmul.f32 %v1257, %v1305
    %v1322 = vpack.c.bf16 %v1307, %v1306
    %v1323 = vpack.c.bf16 %v1309, %v1308
    %v1324 = vpack.c.bf16 %v1311, %v1310
    %v1325 = vpack.c.bf16 %v1313, %v1312
    %v1326 = vpack.c.bf16 %v1315, %v1314
    %v1327 = vpack.c.bf16 %v1317, %v1316
    %v1328 = vpack.c.bf16 %v1319, %v1318
    %v1329 = vpack.c.bf16 %v1321, %v1320
    %v1330 = vpack.c.bf16 %v831, %v828
    %v1331 = vpack.c.bf16 %v839, %v836
    %v1332 = vpack.c.bf16 %v847, %v844
    %v1333 = vpack.c.bf16 %v855, %v852
    %v1334 = vpack.c.bf16 %v863, %v860
    %v1335 = vpack.c.bf16 %v871, %v868
    %v1336 = vpack.c.bf16 %v879, %v876
    %v1337 = vpack.c.bf16 %v887, %v884
    %v1339 = vlaneseq
    %v1340 = vshrl.u32 %v1339, 7
    %v1341 = vsub.s32 0, %v1340
    %v1342 = vrot.slane %v736, %v1341
    %1344 = vmatprep.subr.bf16.mxu0 0
    %1345 = vmatpush1.bf16.msra.mxu0 %v1330
    %1346 = vmatprep.subr.bf16.mxu0 0
    %1347 = vmatpush1.bf16.msra.mxu0 %v1331
    %1348 = vmatprep.subr.bf16.mxu0 0
    %1349 = vmatpush1.bf16.msra.mxu0 %v1332
    %1350 = vmatprep.subr.bf16.mxu0 0
    %1351 = vmatpush1.bf16.msra.mxu0 %v1333
    %1352 = vmatprep.subr.bf16.mxu0 0
    %1353 = vmatpush1.bf16.msra.mxu0 %v1334
    %1354 = vmatprep.subr.bf16.mxu0 0
    %1355 = vmatpush1.bf16.msra.mxu0 %v1335
    %1356 = vmatprep.subr.bf16.mxu0 0
    %1357 = vmatpush1.bf16.msra.mxu0 %v1336
    %1358 = vmatprep.subr.bf16.mxu0 0
    %1359 = vmatpush1.bf16.msra.mxu0 %v1337
    %1360 = vmatprep.subr.bf16.mxu0 0
    %1361 = vmatpush1.bf16.msra.mxu0 0
    %1362 = vmatprep.subr.bf16.mxu0 0
    %1363 = vmatpush1.bf16.msra.mxu0 0
    %1364 = vmatprep.subr.bf16.mxu0 0
    %1365 = vmatpush1.bf16.msra.mxu0 0
    %1366 = vmatprep.subr.bf16.mxu0 0
    %1367 = vmatpush1.bf16.msra.mxu0 0
    %1368 = vmatprep.subr.bf16.mxu0 0
    %1369 = vmatpush1.bf16.msra.mxu0 0
    %1370 = vmatprep.subr.bf16.mxu0 0
    %1371 = vmatpush1.bf16.msra.mxu0 0
    %1372 = vmatprep.subr.bf16.mxu0 0
    %1373 = vmatpush1.bf16.msra.mxu0 0
    %1374 = vmatprep.subr.bf16.mxu0 0
    %1375 = vmatpush1.bf16.msra.mxu0 0
    %1376 = vmatprep.mubr.bf16.mxu0 0
    %1377 = vmatmul.mubr.bf16.gmra.mrb[0].mxu0 %v1322
    %v1378 = vpop.f32.mrb[0].mxu0
    %v1379 = vadd.f32 %v1342, %v1378
    %v1380 = vpop.f32.mrb[0].mxu0
    %v1381 = vpop.f32.mrb[0].mxu0
    %v1382 = vadd.f32 %v1342, %v1381
    %v1383 = vpop.f32.mrb[0].mxu0
    %1384 = vmatprep.mubr.bf16.mxu0 0
    %1385 = vmatmul.mubr.bf16.gmra.mrb[0].mxu0 %v1323
    %v1386 = vpop.f32.mrb[0].mxu0
    %v1387 = vadd.f32 %v1342, %v1386
    %v1388 = vpop.f32.mrb[0].mxu0
    %v1389 = vpop.f32.mrb[0].mxu0
    %v1390 = vadd.f32 %v1342, %v1389
    %v1391 = vpop.f32.mrb[0].mxu0
    %1392 = vmatprep.mubr.bf16.mxu0 0
    %1393 = vmatmul.mubr.bf16.gmra.mrb[0].mxu0 %v1324
    %v1394 = vpop.f32.mrb[0].mxu0
    %v1395 = vadd.f32 %v1342, %v1394
    %v1396 = vpop.f32.mrb[0].mxu0
    %v1397 = vpop.f32.mrb[0].mxu0
    %v1398 = vadd.f32 %v1342, %v1397
    %v1399 = vpop.f32.mrb[0].mxu0
    %1400 = vmatprep.mubr.bf16.mxu0 0
    %1401 = vmatmul.mubr.bf16.gmra.mrb[0].mxu0 %v1325
    %v1402 = vpop.f32.mrb[0].mxu0
    %v1403 = vadd.f32 %v1342, %v1402
    %v1404 = vpop.f32.mrb[0].mxu0
    %v1405 = vpop.f32.mrb[0].mxu0
    %v1406 = vadd.f32 %v1342, %v1405
    %v1407 = vpop.f32.mrb[0].mxu0
    %1408 = vmatprep.mubr.bf16.mxu0 0
    %1409 = vmatmul.mubr.bf16.gmra.mrb[0].mxu0 %v1326
    %v1410 = vpop.f32.mrb[0].mxu0
    %v1411 = vadd.f32 %v1342, %v1410
    %v1412 = vpop.f32.mrb[0].mxu0
    %v1413 = vpop.f32.mrb[0].mxu0
    %v1414 = vadd.f32 %v1342, %v1413
    %v1415 = vpop.f32.mrb[0].mxu0
    %1416 = vmatprep.mubr.bf16.mxu0 0
    %1417 = vmatmul.mubr.bf16.gmra.mrb[0].mxu0 %v1327
    %v1418 = vpop.f32.mrb[0].mxu0
    %v1419 = vadd.f32 %v1342, %v1418
    %v1420 = vpop.f32.mrb[0].mxu0
    %v1421 = vpop.f32.mrb[0].mxu0
    %v1422 = vadd.f32 %v1342, %v1421
    %v1423 = vpop.f32.mrb[0].mxu0
    %1424 = vmatprep.mubr.bf16.mxu0 0
    %1425 = vmatmul.mubr.bf16.gmra.mrb[0].mxu0 %v1328
    %v1426 = vpop.f32.mrb[0].mxu0
    %v1427 = vadd.f32 %v1342, %v1426
    %v1428 = vpop.f32.mrb[0].mxu0
    %v1429 = vpop.f32.mrb[0].mxu0
    %v1430 = vadd.f32 %v1342, %v1429
    %v1431 = vpop.f32.mrb[0].mxu0
    %1432 = vmatprep.mubr.bf16.mxu0 0
    %1433 = vmatmul.mubr.bf16.gmra.mrb[0].mxu0 %v1329
    %v1434 = vpop.f32.mrb[0].mxu0
    %v1435 = vadd.f32 %v1342, %v1434
    %v1436 = vpop.f32.mrb[0].mxu0
    %v1437 = vpop.f32.mrb[0].mxu0
    %v1438 = vadd.f32 %v1342, %v1437
    %v1439 = vpop.f32.mrb[0].mxu0
    %1440 = vdwg.mxu0
    %v1441 = vmax.f32 %v1379, 0.0
    %v1442 = vmax.f32 %v1382, 0.0
    %v1443 = vmax.f32 %v1387, 0.0
    %v1444 = vmax.f32 %v1390, 0.0
    %v1445 = vmax.f32 %v1395, 0.0
    %v1446 = vmax.f32 %v1398, 0.0
    %v1447 = vmax.f32 %v1403, 0.0
    %v1448 = vmax.f32 %v1406, 0.0
    %v1449 = vmax.f32 %v1411, 0.0
    %v1450 = vmax.f32 %v1414, 0.0
    %v1451 = vmax.f32 %v1419, 0.0
    %v1452 = vmax.f32 %v1422, 0.0
    %v1453 = vmax.f32 %v1427, 0.0
    %v1454 = vmax.f32 %v1430, 0.0
    %v1455 = vmax.f32 %v1435, 0.0
    %v1456 = vmax.f32 %v1438, 0.0
    %v1457 = vpack.c.bf16 %v1442, %v1441
    %v1458 = vpack.c.bf16 %v1444, %v1443
    %v1459 = vpack.c.bf16 %v1446, %v1445
    %v1460 = vpack.c.bf16 %v1448, %v1447
    %v1461 = vpack.c.bf16 %v1450, %v1449
    %v1462 = vpack.c.bf16 %v1452, %v1451
    %v1463 = vpack.c.bf16 %v1454, %v1453
    %v1464 = vpack.c.bf16 %v1456, %v1455
    %1465 = vmatprep.subr.bf16.mxu0 0
    %1466 = vmatpush1.bf16.msra.mxu0 %v777
    %1467 = vmatprep.subr.bf16.mxu0 0
    %1468 = vmatpush1.bf16.msra.mxu0 %v778
    %1469 = vmatprep.subr.bf16.mxu0 0
    %1470 = vmatpush1.bf16.msra.mxu0 %v779
    %1471 = vmatprep.subr.bf16.mxu0 0
    %1472 = vmatpush1.bf16.msra.mxu0 %v780
    %1473 = vmatprep.subr.bf16.mxu0 0
    %1474 = vmatpush1.bf16.msra.mxu0 %v781
    %1475 = vmatprep.subr.bf16.mxu0 0
    %1476 = vmatpush1.bf16.msra.mxu0 %v782
    %1477 = vmatprep.subr.bf16.mxu0 0
    %1478 = vmatpush1.bf16.msra.mxu0 %v783
    %1479 = vmatprep.subr.bf16.mxu0 0
    %1480 = vmatpush1.bf16.msra.mxu0 %v784
    %1481 = vmatprep.subr.bf16.mxu0 0
    %1482 = vmatpush1.bf16.msra.mxu0 0
    %1483 = vmatprep.subr.bf16.mxu0 0
    %1484 = vmatpush1.bf16.msra.mxu0 0
    %1485 = vmatprep.subr.bf16.mxu0 0
    %1486 = vmatpush1.bf16.msra.mxu0 0
    %1487 = vmatprep.subr.bf16.mxu0 0
    %1488 = vmatpush1.bf16.msra.mxu0 0
    %1489 = vmatprep.subr.bf16.mxu0 0
    %1490 = vmatpush1.bf16.msra.mxu0 0
    %1491 = vmatprep.subr.bf16.mxu0 0
    %1492 = vmatpush1.bf16.msra.mxu0 0
    %1493 = vmatprep.subr.bf16.mxu0 0
    %1494 = vmatpush1.bf16.msra.mxu0 0
    %1495 = vmatprep.subr.bf16.mxu0 0
    %1496 = vmatpush1.bf16.msra.mxu0 0
    %1497 = vmatprep.mubr.bf16.mxu0 0
    %1498 = vmatmul.mubr.bf16.gmra.mrb[0].mxu0 %v1457
    %v1499 = vpop.f32.mrb[0].mxu0
    %v1500 = vadd.f32 0.0, %v1499
    %v1501 = vpop.f32.mrb[0].mxu0
    %v1502 = vpop.f32.mrb[0].mxu0
    %v1503 = vadd.f32 0.0, %v1502
    %v1504 = vpop.f32.mrb[0].mxu0
    %1505 = vmatprep.mubr.bf16.mxu0 0
    %1506 = vmatmul.mubr.bf16.gmra.mrb[0].mxu0 %v1458
    %v1507 = vpop.f32.mrb[0].mxu0
    %v1508 = vadd.f32 0.0, %v1507
    %v1509 = vpop.f32.mrb[0].mxu0
    %v1510 = vpop.f32.mrb[0].mxu0
    %v1511 = vadd.f32 0.0, %v1510
    %v1512 = vpop.f32.mrb[0].mxu0
    %1513 = vmatprep.mubr.bf16.mxu0 0
    %1514 = vmatmul.mubr.bf16.gmra.mrb[0].mxu0 %v1459
    %v1515 = vpop.f32.mrb[0].mxu0
    %v1516 = vadd.f32 0.0, %v1515
    %v1517 = vpop.f32.mrb[0].mxu0
    %v1518 = vpop.f32.mrb[0].mxu0
    %v1519 = vadd.f32 0.0, %v1518
    %v1520 = vpop.f32.mrb[0].mxu0
    %1521 = vmatprep.mubr.bf16.mxu0 0
    %1522 = vmatmul.mubr.bf16.gmra.mrb[0].mxu0 %v1460
    %v1523 = vpop.f32.mrb[0].mxu0
    %v1524 = vadd.f32 0.0, %v1523
    %v1525 = vpop.f32.mrb[0].mxu0
    %v1526 = vpop.f32.mrb[0].mxu0
    %v1527 = vadd.f32 0.0, %v1526
    %v1528 = vpop.f32.mrb[0].mxu0
    %1529 = vmatprep.mubr.bf16.mxu0 0
    %1530 = vmatmul.mubr.bf16.gmra.mrb[0].mxu0 %v1461
    %v1531 = vpop.f32.mrb[0].mxu0
    %v1532 = vadd.f32 0.0, %v1531
    %v1533 = vpop.f32.mrb[0].mxu0
    %v1534 = vpop.f32.mrb[0].mxu0
    %v1535 = vadd.f32 0.0, %v1534
    %v1536 = vpop.f32.mrb[0].mxu0
    %1537 = vmatprep.mubr.bf16.mxu0 0
    %1538 = vmatmul.mubr.bf16.gmra.mrb[0].mxu0 %v1462
    %v1539 = vpop.f32.mrb[0].mxu0
    %v1540 = vadd.f32 0.0, %v1539
    %v1541 = vpop.f32.mrb[0].mxu0
    %v1542 = vpop.f32.mrb[0].mxu0
    %v1543 = vadd.f32 0.0, %v1542
    %v1544 = vpop.f32.mrb[0].mxu0
    %1545 = vmatprep.mubr.bf16.mxu0 0
    %1546 = vmatmul.mubr.bf16.gmra.mrb[0].mxu0 %v1463
    %v1547 = vpop.f32.mrb[0].mxu0
    %v1548 = vadd.f32 0.0, %v1547
    %v1549 = vpop.f32.mrb[0].mxu0
    %v1550 = vpop.f32.mrb[0].mxu0
    %v1551 = vadd.f32 0.0, %v1550
    %v1552 = vpop.f32.mrb[0].mxu0
    %1553 = vmatprep.mubr.bf16.mxu0 0
    %1554 = vmatmul.mubr.bf16.gmra.mrb[0].mxu0 %v1464
    %v1555 = vpop.f32.mrb[0].mxu0
    %v1556 = vadd.f32 0.0, %v1555
    %v1557 = vpop.f32.mrb[0].mxu0
    %v1558 = vpop.f32.mrb[0].mxu0
    %v1559 = vadd.f32 0.0, %v1558
    %v1560 = vpop.f32.mrb[0].mxu0
    %1561 = vdwg.mxu0
    %v1562 = vmul.f32 %v1500, %v894
    %v1563 = vmul.f32 %v1503, %v894
    %v1564 = vmul.f32 %v1508, %v894
    %v1565 = vmul.f32 %v1511, %v894
    %v1566 = vmul.f32 %v1516, %v894
    %v1567 = vmul.f32 %v1519, %v894
    %v1568 = vmul.f32 %v1524, %v894
    %v1569 = vmul.f32 %v1527, %v894
    %v1570 = vmul.f32 %v1532, %v894
    %v1571 = vmul.f32 %v1535, %v894
    %v1572 = vmul.f32 %v1540, %v894
    %v1573 = vmul.f32 %v1543, %v894
    %v1574 = vmul.f32 %v1548, %v894
    %v1575 = vmul.f32 %v1551, %v894
    %v1576 = vmul.f32 %v1556, %v894
    %v1577 = vmul.f32 %v1559, %v894
    %1578 = vadd.xlane.f32.xlu0 %v1562
    %v1579 = vpop.xlane.xlu0 %1578
    %1580 = vadd.xlane.f32.xlu0 %v1563
    %v1581 = vpop.xlane.xlu0 %1580
    %1582 = vadd.xlane.f32.xlu0 %v1564
    %v1583 = vpop.xlane.xlu0 %1582
    %1584 = vadd.xlane.f32.xlu0 %v1565
    %v1585 = vpop.xlane.xlu0 %1584
    %1586 = vadd.xlane.f32.xlu0 %v1566
    %v1587 = vpop.xlane.xlu0 %1586
    %1588 = vadd.xlane.f32.xlu0 %v1567
    %v1589 = vpop.xlane.xlu0 %1588
    %1590 = vadd.xlane.f32.xlu0 %v1568
    %v1591 = vpop.xlane.xlu0 %1590
    %1592 = vadd.xlane.f32.xlu0 %v1569
    %v1593 = vpop.xlane.xlu0 %1592
    %1594 = vadd.xlane.f32.xlu0 %v1570
    %v1595 = vpop.xlane.xlu0 %1594
    %1596 = vadd.xlane.f32.xlu0 %v1571
    %v1597 = vpop.xlane.xlu0 %1596
    %1598 = vadd.xlane.f32.xlu0 %v1572
    %v1599 = vpop.xlane.xlu0 %1598
    %1600 = vadd.xlane.f32.xlu0 %v1573
    %v1601 = vpop.xlane.xlu0 %1600
    %1602 = vadd.xlane.f32.xlu0 %v1574
    %v1603 = vpop.xlane.xlu0 %1602
    %1604 = vadd.xlane.f32.xlu0 %v1575
    %v1605 = vpop.xlane.xlu0 %1604
    %1606 = vadd.xlane.f32.xlu0 %v1576
    %v1607 = vpop.xlane.xlu0 %1606
    %1608 = vadd.xlane.f32.xlu0 %v1577
    %v1609 = vpop.xlane.xlu0 %1608
    %v1610 = vmul.f32 %v1500, %v948
    %v1611 = vmul.f32 %v1503, %v948
    %v1612 = vmul.f32 %v1508, %v948
    %v1613 = vmul.f32 %v1511, %v948
    %v1614 = vmul.f32 %v1516, %v948
    %v1615 = vmul.f32 %v1519, %v948
    %v1616 = vmul.f32 %v1524, %v948
    %v1617 = vmul.f32 %v1527, %v948
    %v1618 = vmul.f32 %v1532, %v948
    %v1619 = vmul.f32 %v1535, %v948
    %v1620 = vmul.f32 %v1540, %v948
    %v1621 = vmul.f32 %v1543, %v948
    %v1622 = vmul.f32 %v1548, %v948
    %v1623 = vmul.f32 %v1551, %v948
    %v1624 = vmul.f32 %v1556, %v948
    %v1625 = vmul.f32 %v1559, %v948
    %1626 = vadd.xlane.f32.xlu0 %v1610
    %v1627 = vpop.xlane.xlu0 %1626
    %1628 = vadd.xlane.f32.xlu0 %v1611
    %v1629 = vpop.xlane.xlu0 %1628
    %1630 = vadd.xlane.f32.xlu0 %v1612
    %v1631 = vpop.xlane.xlu0 %1630
    %1632 = vadd.xlane.f32.xlu0 %v1613
    %v1633 = vpop.xlane.xlu0 %1632
    %1634 = vadd.xlane.f32.xlu0 %v1614
    %v1635 = vpop.xlane.xlu0 %1634
    %1636 = vadd.xlane.f32.xlu0 %v1615
    %v1637 = vpop.xlane.xlu0 %1636
    %1638 = vadd.xlane.f32.xlu0 %v1616
    %v1639 = vpop.xlane.xlu0 %1638
    %1640 = vadd.xlane.f32.xlu0 %v1617
    %v1641 = vpop.xlane.xlu0 %1640
    %1642 = vadd.xlane.f32.xlu0 %v1618
    %v1643 = vpop.xlane.xlu0 %1642
    %1644 = vadd.xlane.f32.xlu0 %v1619
    %v1645 = vpop.xlane.xlu0 %1644
    %1646 = vadd.xlane.f32.xlu0 %v1620
    %v1647 = vpop.xlane.xlu0 %1646
    %1648 = vadd.xlane.f32.xlu0 %v1621
    %v1649 = vpop.xlane.xlu0 %1648
    %1650 = vadd.xlane.f32.xlu0 %v1622
    %v1651 = vpop.xlane.xlu0 %1650
    %1652 = vadd.xlane.f32.xlu0 %v1623
    %v1653 = vpop.xlane.xlu0 %1652
    %1654 = vadd.xlane.f32.xlu0 %v1624
    %v1655 = vpop.xlane.xlu0 %1654
    %1656 = vadd.xlane.f32.xlu0 %v1625
    %v1657 = vpop.xlane.xlu0 %1656
    %1658 = vxpose.xlu0.b32.start [1/16] %v1579, 128
    %1659 = vxpose.xlu0.b32.cont [2/16] %v1581, 128
    %1660 = vxpose.xlu0.b32.cont [3/16] %v1583, 128
    %1661 = vxpose.xlu0.b32.cont [4/16] %v1585, 128
    %1662 = vxpose.xlu0.b32.cont [5/16] %v1587, 128
    %1663 = vxpose.xlu0.b32.cont [6/16] %v1589, 128
    %1664 = vxpose.xlu0.b32.cont [7/16] %v1591, 128
    %1665 = vxpose.xlu0.b32.cont [8/16] %v1593, 128
    %1666 = vxpose.xlu0.b32.cont [9/16] %v1595, 128
    %1667 = vxpose.xlu0.b32.cont [10/16] %v1597, 128
    %1668 = vxpose.xlu0.b32.cont [11/16] %v1599, 128
    %1669 = vxpose.xlu0.b32.cont [12/16] %v1601, 128
    %1670 = vxpose.xlu0.b32.cont [13/16] %v1603, 128
    %1671 = vxpose.xlu0.b32.cont [14/16] %v1605, 128
    %1672 = vxpose.xlu0.b32.cont [15/16] %v1607, 128
    %1673 = vxpose.xlu0.b32.end [16/16] %v1609, 128
    %v1674 = vpop.trf.xlu0
    %v1675 = vpop.trf.xlu0
    %v1676 = vpop.trf.xlu0
    %v1677 = vpop.trf.xlu0
    %v1678 = vpop.trf.xlu0
    %v1679 = vpop.trf.xlu0
    %v1680 = vpop.trf.xlu0
    %v1681 = vpop.trf.xlu0
    %v1682 = vpop.trf.xlu0
    %v1683 = vpop.trf.xlu0
    %v1684 = vpop.trf.xlu0
    %v1685 = vpop.trf.xlu0
    %v1686 = vpop.trf.xlu0
    %v1687 = vpop.trf.xlu0
    %v1688 = vpop.trf.xlu0
    %v1689 = vpop.trf.xlu0
    %v1690 = vlaneseq
    %v1691 = vshrl.u32 %v1690, 7
    %v1692 = vsub.s32 0, %v1691
    %v1693 = vrot.slane %v1674, %v1692
    %v1694 = vadd.f32 %v1627, %v1693
    %v1695 = vadd.f32 %v1629, %v1693
    %v1696 = vadd.f32 %v1631, %v1693
    %v1697 = vadd.f32 %v1633, %v1693
    %v1698 = vadd.f32 %v1635, %v1693
    %v1699 = vadd.f32 %v1637, %v1693
    %v1700 = vadd.f32 %v1639, %v1693
    %v1701 = vadd.f32 %v1641, %v1693
    %v1702 = vadd.f32 %v1643, %v1693
    %v1703 = vadd.f32 %v1645, %v1693
    %v1704 = vadd.f32 %v1647, %v1693
    %v1705 = vadd.f32 %v1649, %v1693
    %v1706 = vadd.f32 %v1651, %v1693
    %v1707 = vadd.f32 %v1653, %v1693
    %v1708 = vadd.f32 %v1655, %v1693
    %v1709 = vadd.f32 %v1657, %v1693
    %vm1710 = vcmp.gt.f32.partialorder %v1694, 0.0
    %vm1711 = vcmp.gt.f32.partialorder %v1695, 0.0
    %vm1712 = vcmp.gt.f32.partialorder %v1696, 0.0
    %vm1713 = vcmp.gt.f32.partialorder %v1697, 0.0
    %vm1714 = vcmp.gt.f32.partialorder %v1698, 0.0
    %vm1715 = vcmp.gt.f32.partialorder %v1699, 0.0
    %vm1716 = vcmp.gt.f32.partialorder %v1700, 0.0
    %vm1717 = vcmp.gt.f32.partialorder %v1701, 0.0
    %vm1718 = vcmp.gt.f32.partialorder %v1702, 0.0
    %vm1719 = vcmp.gt.f32.partialorder %v1703, 0.0
    %vm1720 = vcmp.gt.f32.partialorder %v1704, 0.0
    %vm1721 = vcmp.gt.f32.partialorder %v1705, 0.0
    %vm1722 = vcmp.gt.f32.partialorder %v1706, 0.0
    %vm1723 = vcmp.gt.f32.partialorder %v1707, 0.0
    %vm1724 = vcmp.gt.f32.partialorder %v1708, 0.0
    %vm1725 = vcmp.gt.f32.partialorder %v1709, 0.0
    %v1726 = vmul.f32 %v1694, 0.2
    %v1727 = vmul.f32 %v1695, 0.2
    %v1728 = vmul.f32 %v1696, 0.2
    %v1729 = vmul.f32 %v1697, 0.2
    %v1730 = vmul.f32 %v1698, 0.2
    %v1731 = vmul.f32 %v1699, 0.2
    %v1732 = vmul.f32 %v1700, 0.2
    %v1733 = vmul.f32 %v1701, 0.2
    %v1734 = vmul.f32 %v1702, 0.2
    %v1735 = vmul.f32 %v1703, 0.2
    %v1736 = vmul.f32 %v1704, 0.2
    %v1737 = vmul.f32 %v1705, 0.2
    %v1738 = vmul.f32 %v1706, 0.2
    %v1739 = vmul.f32 %v1707, 0.2
    %v1740 = vmul.f32 %v1708, 0.2
    %v1741 = vmul.f32 %v1709, 0.2
    %v1742 = vsel %vm1710, %v1694, %v1726
    %v1743 = vsel %vm1711, %v1695, %v1727
    %v1744 = vsel %vm1712, %v1696, %v1728
    %v1745 = vsel %vm1713, %v1697, %v1729
    %v1746 = vsel %vm1714, %v1698, %v1730
    %v1747 = vsel %vm1715, %v1699, %v1731
    %v1748 = vsel %vm1716, %v1700, %v1732
    %v1749 = vsel %vm1717, %v1701, %v1733
    %v1750 = vsel %vm1718, %v1702, %v1734
    %v1751 = vsel %vm1719, %v1703, %v1735
    %v1752 = vsel %vm1720, %v1704, %v1736
    %v1753 = vsel %vm1721, %v1705, %v1737
    %v1754 = vsel %vm1722, %v1706, %v1738
    %v1755 = vsel %vm1723, %v1707, %v1739
    %v1756 = vsel %vm1724, %v1708, %v1740
    %v1757 = vsel %vm1725, %v1709, %v1741
    %v1758 = vsel %vm1130, %v1742, -1e+30
    %v1759 = vsel %vm1131, %v1743, -1e+30
    %v1760 = vsel %vm1132, %v1744, -1e+30
    %v1761 = vsel %vm1133, %v1745, -1e+30
    %v1762 = vsel %vm1134, %v1746, -1e+30
    %v1763 = vsel %vm1135, %v1747, -1e+30
    %v1764 = vsel %vm1136, %v1748, -1e+30
    %v1765 = vsel %vm1137, %v1749, -1e+30
    %v1766 = vsel %vm1138, %v1750, -1e+30
    %v1767 = vsel %vm1139, %v1751, -1e+30
    %v1768 = vsel %vm1140, %v1752, -1e+30
    %v1769 = vsel %vm1141, %v1753, -1e+30
    %v1770 = vsel %vm1142, %v1754, -1e+30
    %v1771 = vsel %vm1143, %v1755, -1e+30
    %v1772 = vsel %vm1144, %v1756, -1e+30
    %v1773 = vsel %vm1145, %v1757, -1e+30
    %1774 = vmax.xlane.f32.xlu0 %v1758
    %v1775 = vpop.xlane.xlu0 %1774
    %1776 = vmax.xlane.f32.xlu0 %v1759
    %v1777 = vpop.xlane.xlu0 %1776
    %1778 = vmax.xlane.f32.xlu0 %v1760
    %v1779 = vpop.xlane.xlu0 %1778
    %1780 = vmax.xlane.f32.xlu0 %v1761
    %v1781 = vpop.xlane.xlu0 %1780
    %1782 = vmax.xlane.f32.xlu0 %v1762
    %v1783 = vpop.xlane.xlu0 %1782
    %1784 = vmax.xlane.f32.xlu0 %v1763
    %v1785 = vpop.xlane.xlu0 %1784
    %1786 = vmax.xlane.f32.xlu0 %v1764
    %v1787 = vpop.xlane.xlu0 %1786
    %1788 = vmax.xlane.f32.xlu0 %v1765
    %v1789 = vpop.xlane.xlu0 %1788
    %1790 = vmax.xlane.f32.xlu0 %v1766
    %v1791 = vpop.xlane.xlu0 %1790
    %1792 = vmax.xlane.f32.xlu0 %v1767
    %v1793 = vpop.xlane.xlu0 %1792
    %1794 = vmax.xlane.f32.xlu0 %v1768
    %v1795 = vpop.xlane.xlu0 %1794
    %1796 = vmax.xlane.f32.xlu0 %v1769
    %v1797 = vpop.xlane.xlu0 %1796
    %1798 = vmax.xlane.f32.xlu0 %v1770
    %v1799 = vpop.xlane.xlu0 %1798
    %1800 = vmax.xlane.f32.xlu0 %v1771
    %v1801 = vpop.xlane.xlu0 %1800
    %1802 = vmax.xlane.f32.xlu0 %v1772
    %v1803 = vpop.xlane.xlu0 %1802
    %1804 = vmax.xlane.f32.xlu0 %v1773
    %v1805 = vpop.xlane.xlu0 %1804
    %v1806 = vsub.f32 %v1758, %v1775
    %v1807 = vsub.f32 %v1759, %v1777
    %v1808 = vsub.f32 %v1760, %v1779
    %v1809 = vsub.f32 %v1761, %v1781
    %v1810 = vsub.f32 %v1762, %v1783
    %v1811 = vsub.f32 %v1763, %v1785
    %v1812 = vsub.f32 %v1764, %v1787
    %v1813 = vsub.f32 %v1765, %v1789
    %v1814 = vsub.f32 %v1766, %v1791
    %v1815 = vsub.f32 %v1767, %v1793
    %v1816 = vsub.f32 %v1768, %v1795
    %v1817 = vsub.f32 %v1769, %v1797
    %v1818 = vsub.f32 %v1770, %v1799
    %v1819 = vsub.f32 %v1771, %v1801
    %v1820 = vsub.f32 %v1772, %v1803
    %v1821 = vsub.f32 %v1773, %v1805
    %v1822 = vmul.f32 %v1806, 1.442695
    %v1823 = vpow.pop %v1822
    %v1824 = vmul.f32 %v1807, 1.442695
    %v1825 = vpow.pop %v1824
    %v1826 = vmul.f32 %v1808, 1.442695
    %v1827 = vpow.pop %v1826
    %v1828 = vmul.f32 %v1809, 1.442695
    %v1829 = vpow.pop %v1828
    %v1830 = vmul.f32 %v1810, 1.442695
    %v1831 = vpow.pop %v1830
    %v1832 = vmul.f32 %v1811, 1.442695
    %v1833 = vpow.pop %v1832
    %v1834 = vmul.f32 %v1812, 1.442695
    %v1835 = vpow.pop %v1834
    %v1836 = vmul.f32 %v1813, 1.442695
    %v1837 = vpow.pop %v1836
    %v1838 = vmul.f32 %v1814, 1.442695
    %v1839 = vpow.pop %v1838
    %v1840 = vmul.f32 %v1815, 1.442695
    %v1841 = vpow.pop %v1840
    %v1842 = vmul.f32 %v1816, 1.442695
    %v1843 = vpow.pop %v1842
    %v1844 = vmul.f32 %v1817, 1.442695
    %v1845 = vpow.pop %v1844
    %v1846 = vmul.f32 %v1818, 1.442695
    %v1847 = vpow.pop %v1846
    %v1848 = vmul.f32 %v1819, 1.442695
    %v1849 = vpow.pop %v1848
    %v1850 = vmul.f32 %v1820, 1.442695
    %v1851 = vpow.pop %v1850
    %v1852 = vmul.f32 %v1821, 1.442695
    %v1853 = vpow.pop %v1852
    %v1854 = vsel %vm1130, %v1823, 0.0
    %v1855 = vsel %vm1131, %v1825, 0.0
    %v1856 = vsel %vm1132, %v1827, 0.0
    %v1857 = vsel %vm1133, %v1829, 0.0
    %v1858 = vsel %vm1134, %v1831, 0.0
    %v1859 = vsel %vm1135, %v1833, 0.0
    %v1860 = vsel %vm1136, %v1835, 0.0
    %v1861 = vsel %vm1137, %v1837, 0.0
    %v1862 = vsel %vm1138, %v1839, 0.0
    %v1863 = vsel %vm1139, %v1841, 0.0
    %v1864 = vsel %vm1140, %v1843, 0.0
    %v1865 = vsel %vm1141, %v1845, 0.0
    %v1866 = vsel %vm1142, %v1847, 0.0
    %v1867 = vsel %vm1143, %v1849, 0.0
    %v1868 = vsel %vm1144, %v1851, 0.0
    %v1869 = vsel %vm1145, %v1853, 0.0
    %1870 = vadd.xlane.f32.xlu0 %v1854
    %v1871 = vpop.xlane.xlu0 %1870
    %1872 = vadd.xlane.f32.xlu0 %v1855
    %v1873 = vpop.xlane.xlu0 %1872
    %1874 = vadd.xlane.f32.xlu0 %v1856
    %v1875 = vpop.xlane.xlu0 %1874
    %1876 = vadd.xlane.f32.xlu0 %v1857
    %v1877 = vpop.xlane.xlu0 %1876
    %1878 = vadd.xlane.f32.xlu0 %v1858
    %v1879 = vpop.xlane.xlu0 %1878
    %1880 = vadd.xlane.f32.xlu0 %v1859
    %v1881 = vpop.xlane.xlu0 %1880
    %1882 = vadd.xlane.f32.xlu0 %v1860
    %v1883 = vpop.xlane.xlu0 %1882
    %1884 = vadd.xlane.f32.xlu0 %v1861
    %v1885 = vpop.xlane.xlu0 %1884
    %1886 = vadd.xlane.f32.xlu0 %v1862
    %v1887 = vpop.xlane.xlu0 %1886
    %1888 = vadd.xlane.f32.xlu0 %v1863
    %v1889 = vpop.xlane.xlu0 %1888
    %1890 = vadd.xlane.f32.xlu0 %v1864
    %v1891 = vpop.xlane.xlu0 %1890
    %1892 = vadd.xlane.f32.xlu0 %v1865
    %v1893 = vpop.xlane.xlu0 %1892
    %1894 = vadd.xlane.f32.xlu0 %v1866
    %v1895 = vpop.xlane.xlu0 %1894
    %1896 = vadd.xlane.f32.xlu0 %v1867
    %v1897 = vpop.xlane.xlu0 %1896
    %1898 = vadd.xlane.f32.xlu0 %v1868
    %v1899 = vpop.xlane.xlu0 %1898
    %1900 = vadd.xlane.f32.xlu0 %v1869
    %v1901 = vpop.xlane.xlu0 %1900
    %v1902 = vrcp.pop %v1871
    %v1903 = vrcp.pop %v1873
    %v1904 = vrcp.pop %v1875
    %v1905 = vrcp.pop %v1877
    %v1906 = vrcp.pop %v1879
    %v1907 = vrcp.pop %v1881
    %v1908 = vrcp.pop %v1883
    %v1909 = vrcp.pop %v1885
    %v1910 = vrcp.pop %v1887
    %v1911 = vrcp.pop %v1889
    %v1912 = vrcp.pop %v1891
    %v1913 = vrcp.pop %v1893
    %v1914 = vrcp.pop %v1895
    %v1915 = vrcp.pop %v1897
    %v1916 = vrcp.pop %v1899
    %v1917 = vrcp.pop %v1901
    %v1918 = vmul.f32 %v1854, %v1902
    %v1919 = vmul.f32 %v1855, %v1903
    %v1920 = vmul.f32 %v1856, %v1904
    %v1921 = vmul.f32 %v1857, %v1905
    %v1922 = vmul.f32 %v1858, %v1906
    %v1923 = vmul.f32 %v1859, %v1907
    %v1924 = vmul.f32 %v1860, %v1908
    %v1925 = vmul.f32 %v1861, %v1909
    %v1926 = vmul.f32 %v1862, %v1910
    %v1927 = vmul.f32 %v1863, %v1911
    %v1928 = vmul.f32 %v1864, %v1912
    %v1929 = vmul.f32 %v1865, %v1913
    %v1930 = vmul.f32 %v1866, %v1914
    %v1931 = vmul.f32 %v1867, %v1915
    %v1932 = vmul.f32 %v1868, %v1916
    %v1933 = vmul.f32 %v1869, %v1917
    %v1934 = vpack.c.bf16 %v1919, %v1918
    %v1935 = vpack.c.bf16 %v1921, %v1920
    %v1936 = vpack.c.bf16 %v1923, %v1922
    %v1937 = vpack.c.bf16 %v1925, %v1924
    %v1938 = vpack.c.bf16 %v1927, %v1926
    %v1939 = vpack.c.bf16 %v1929, %v1928
    %v1940 = vpack.c.bf16 %v1931, %v1930
    %v1941 = vpack.c.bf16 %v1933, %v1932
    %v1942 = vpack.c.bf16 %v1503, %v1500
    %v1943 = vpack.c.bf16 %v1511, %v1508
    %v1944 = vpack.c.bf16 %v1519, %v1516
    %v1945 = vpack.c.bf16 %v1527, %v1524
    %v1946 = vpack.c.bf16 %v1535, %v1532
    %v1947 = vpack.c.bf16 %v1543, %v1540
    %v1948 = vpack.c.bf16 %v1551, %v1548
    %v1949 = vpack.c.bf16 %v1559, %v1556
    %1950 = vmatprep.subr.bf16.mxu0 0
    %1951 = vmatpush1.bf16.msra.mxu0 %v1942
    %1952 = vmatprep.subr.bf16.mxu0 0
    %1953 = vmatpush1.bf16.msra.mxu0 %v1943
    %1954 = vmatprep.subr.bf16.mxu0 0
    %1955 = vmatpush1.bf16.msra.mxu0 %v1944
    %1956 = vmatprep.subr.bf16.mxu0 0
    %1957 = vmatpush1.bf16.msra.mxu0 %v1945
    %1958 = vmatprep.subr.bf16.mxu0 0
    %1959 = vmatpush1.bf16.msra.mxu0 %v1946
    %1960 = vmatprep.subr.bf16.mxu0 0
    %1961 = vmatpush1.bf16.msra.mxu0 %v1947
    %1962 = vmatprep.subr.bf16.mxu0 0
    %1963 = vmatpush1.bf16.msra.mxu0 %v1948
    %1964 = vmatprep.subr.bf16.mxu0 0
    %1965 = vmatpush1.bf16.msra.mxu0 %v1949
    %1966 = vmatprep.subr.bf16.mxu0 0
    %1967 = vmatpush1.bf16.msra.mxu0 0
    %1968 = vmatprep.subr.bf16.mxu0 0
    %1969 = vmatpush1.bf16.msra.mxu0 0
    %1970 = vmatprep.subr.bf16.mxu0 0
    %1971 = vmatpush1.bf16.msra.mxu0 0
    %1972 = vmatprep.subr.bf16.mxu0 0
    %1973 = vmatpush1.bf16.msra.mxu0 0
    %1974 = vmatprep.subr.bf16.mxu0 0
    %1975 = vmatpush1.bf16.msra.mxu0 0
    %1976 = vmatprep.subr.bf16.mxu0 0
    %1977 = vmatpush1.bf16.msra.mxu0 0
    %1978 = vmatprep.subr.bf16.mxu0 0
    %1979 = vmatpush1.bf16.msra.mxu0 0
    %1980 = vmatprep.subr.bf16.mxu0 0
    %1981 = vmatpush1.bf16.msra.mxu0 0
    %1982 = vmatprep.mubr.bf16.mxu0 0
    %1983 = vmatmul.mubr.bf16.gmra.mrb[0].mxu0 %v1934
    %v1984 = vpop.f32.mrb[0].mxu0
    %v1985 = vadd.f32 %v1342, %v1984
    %v1986 = vpop.f32.mrb[0].mxu0
    %v1987 = vpop.f32.mrb[0].mxu0
    %v1988 = vadd.f32 %v1342, %v1987
    %v1989 = vpop.f32.mrb[0].mxu0
    %1990 = vmatprep.mubr.bf16.mxu0 0
    %1991 = vmatmul.mubr.bf16.gmra.mrb[0].mxu0 %v1935
    %v1992 = vpop.f32.mrb[0].mxu0
    %v1993 = vadd.f32 %v1342, %v1992
    %v1994 = vpop.f32.mrb[0].mxu0
    %v1995 = vpop.f32.mrb[0].mxu0
    %v1996 = vadd.f32 %v1342, %v1995
    %v1997 = vpop.f32.mrb[0].mxu0
    %1998 = vmatprep.mubr.bf16.mxu0 0
    %1999 = vmatmul.mubr.bf16.gmra.mrb[0].mxu0 %v1936
    %v2000 = vpop.f32.mrb[0].mxu0
    %v2001 = vadd.f32 %v1342, %v2000
    %v2002 = vpop.f32.mrb[0].mxu0
    %v2003 = vpop.f32.mrb[0].mxu0
    %v2004 = vadd.f32 %v1342, %v2003
    %v2005 = vpop.f32.mrb[0].mxu0
    %2006 = vmatprep.mubr.bf16.mxu0 0
    %2007 = vmatmul.mubr.bf16.gmra.mrb[0].mxu0 %v1937
    %v2008 = vpop.f32.mrb[0].mxu0
    %v2009 = vadd.f32 %v1342, %v2008
    %v2010 = vpop.f32.mrb[0].mxu0
    %v2011 = vpop.f32.mrb[0].mxu0
    %v2012 = vadd.f32 %v1342, %v2011
    %v2013 = vpop.f32.mrb[0].mxu0
    %2014 = vmatprep.mubr.bf16.mxu0 0
    %2015 = vmatmul.mubr.bf16.gmra.mrb[0].mxu0 %v1938
    %v2016 = vpop.f32.mrb[0].mxu0
    %v2017 = vadd.f32 %v1342, %v2016
    %v2018 = vpop.f32.mrb[0].mxu0
    %v2019 = vpop.f32.mrb[0].mxu0
    %v2020 = vadd.f32 %v1342, %v2019
    %v2021 = vpop.f32.mrb[0].mxu0
    %2022 = vmatprep.mubr.bf16.mxu0 0
    %2023 = vmatmul.mubr.bf16.gmra.mrb[0].mxu0 %v1939
    %v2024 = vpop.f32.mrb[0].mxu0
    %v2025 = vadd.f32 %v1342, %v2024
    %v2026 = vpop.f32.mrb[0].mxu0
    %v2027 = vpop.f32.mrb[0].mxu0
    %v2028 = vadd.f32 %v1342, %v2027
    %v2029 = vpop.f32.mrb[0].mxu0
    %2030 = vmatprep.mubr.bf16.mxu0 0
    %2031 = vmatmul.mubr.bf16.gmra.mrb[0].mxu0 %v1940
    %v2032 = vpop.f32.mrb[0].mxu0
    %v2033 = vadd.f32 %v1342, %v2032
    %v2034 = vpop.f32.mrb[0].mxu0
    %v2035 = vpop.f32.mrb[0].mxu0
    %v2036 = vadd.f32 %v1342, %v2035
    %v2037 = vpop.f32.mrb[0].mxu0
    %2038 = vmatprep.mubr.bf16.mxu0 0
    %2039 = vmatmul.mubr.bf16.gmra.mrb[0].mxu0 %v1941
    %v2040 = vpop.f32.mrb[0].mxu0
    %v2041 = vadd.f32 %v1342, %v2040
    %v2042 = vpop.f32.mrb[0].mxu0
    %v2043 = vpop.f32.mrb[0].mxu0
    %v2044 = vadd.f32 %v1342, %v2043
    %v2045 = vpop.f32.mrb[0].mxu0
    %2046 = vdwg.mxu0
    %v2047 = vmax.f32 %v1985, 0.0
    %v2048 = vmax.f32 %v1988, 0.0
    %v2049 = vmax.f32 %v1993, 0.0
    %v2050 = vmax.f32 %v1996, 0.0
    %v2051 = vmax.f32 %v2001, 0.0
    %v2052 = vmax.f32 %v2004, 0.0
    %v2053 = vmax.f32 %v2009, 0.0
    %v2054 = vmax.f32 %v2012, 0.0
    %v2055 = vmax.f32 %v2017, 0.0
    %v2056 = vmax.f32 %v2020, 0.0
    %v2057 = vmax.f32 %v2025, 0.0
    %v2058 = vmax.f32 %v2028, 0.0
    %v2059 = vmax.f32 %v2033, 0.0
    %v2060 = vmax.f32 %v2036, 0.0
    %v2061 = vmax.f32 %v2041, 0.0
    %v2062 = vmax.f32 %v2044, 0.0
    %v2063 = vpack.c.bf16 %v2048, %v2047
    %v2064 = vpack.c.bf16 %v2050, %v2049
    %v2065 = vpack.c.bf16 %v2052, %v2051
    %v2066 = vpack.c.bf16 %v2054, %v2053
    %v2067 = vpack.c.bf16 %v2056, %v2055
    %v2068 = vpack.c.bf16 %v2058, %v2057
    %v2069 = vpack.c.bf16 %v2060, %v2059
    %v2070 = vpack.c.bf16 %v2062, %v2061
    %v2071 = vld [vmem:[#allocation17] sm:$0xf]
    %v2072 = vld [vmem:[#allocation17 + $0x4] sm:$0xf]
    %v2073 = vld [vmem:[#allocation17 + $0x8] sm:$0xf]
    %v2074 = vld [vmem:[#allocation17 + $0xc] sm:$0xf]
    %v2075 = vld [vmem:[#allocation17 + $0x10] sm:$0xf]
    %v2076 = vld [vmem:[#allocation17 + $0x14] sm:$0xf]
    %v2077 = vld [vmem:[#allocation17 + $0x18] sm:$0xf]
    %v2078 = vld [vmem:[#allocation17 + $0x1c] sm:$0xf]
    %v2079 = vld [vmem:[#allocation17 + $0x20] sm:$0xf]
    %v2080 = vld [vmem:[#allocation17 + $0x24] sm:$0xf]
    %v2081 = vld [vmem:[#allocation17 + $0x28] sm:$0xf]
    %v2082 = vld [vmem:[#allocation17 + $0x2c] sm:$0xf]
    %v2083 = vld [vmem:[#allocation17 + $0x30] sm:$0xf]
    %v2084 = vld [vmem:[#allocation17 + $0x34] sm:$0xf]
    %v2085 = vld [vmem:[#allocation17 + $0x38] sm:$0xf]
    %v2086 = vld [vmem:[#allocation17 + $0x3c] sm:$0xf]
    %v2103 = vunpack.c.l.b16 %v2071
    %v2104 = vunpack.c.l.b16 %v2072
    %v2105 = vunpack.c.l.b16 %v2073
    %v2106 = vunpack.c.l.b16 %v2074
    %v2107 = vunpack.c.l.b16 %v2075
    %v2108 = vunpack.c.l.b16 %v2076
    %v2109 = vunpack.c.l.b16 %v2077
    %v2110 = vunpack.c.l.b16 %v2078
    %v2111 = vunpack.c.l.b16 %v2079
    %v2112 = vunpack.c.l.b16 %v2080
    %v2113 = vunpack.c.l.b16 %v2081
    %v2114 = vunpack.c.l.b16 %v2082
    %v2115 = vunpack.c.l.b16 %v2083
    %v2116 = vunpack.c.l.b16 %v2084
    %v2117 = vunpack.c.l.b16 %v2085
    %v2118 = vunpack.c.l.b16 %v2086
    %v2119 = vpack.c.b16 %v2104, %v2103
    %v2120 = vpack.c.b16 %v2106, %v2105
    %v2121 = vpack.c.b16 %v2108, %v2107
    %v2122 = vpack.c.b16 %v2110, %v2109
    %v2123 = vpack.c.b16 %v2112, %v2111
    %v2124 = vpack.c.b16 %v2114, %v2113
    %v2125 = vpack.c.b16 %v2116, %v2115
    %v2126 = vpack.c.b16 %v2118, %v2117
    %2135 = vmatprep.subr.bf16.mxu0 0
    %2136 = vmatpush1.bf16.msra.mxu0 %v2119
    %2137 = vmatprep.subr.bf16.mxu0 0
    %2138 = vmatpush1.bf16.msra.mxu0 %v2120
    %2139 = vmatprep.subr.bf16.mxu0 0
    %2140 = vmatpush1.bf16.msra.mxu0 %v2121
    %2141 = vmatprep.subr.bf16.mxu0 0
    %2142 = vmatpush1.bf16.msra.mxu0 %v2122
    %2143 = vmatprep.subr.bf16.mxu0 0
    %2144 = vmatpush1.bf16.msra.mxu0 %v2123
    %2145 = vmatprep.subr.bf16.mxu0 0
    %2146 = vmatpush1.bf16.msra.mxu0 %v2124
    %2147 = vmatprep.subr.bf16.mxu0 0
    %2148 = vmatpush1.bf16.msra.mxu0 %v2125
    %2149 = vmatprep.subr.bf16.mxu0 0
    %2150 = vmatpush1.bf16.msra.mxu0 %v2126
    %2151 = vmatprep.subr.bf16.mxu0 0
    %2152 = vmatpush1.bf16.msra.mxu0 0
    %2153 = vmatprep.subr.bf16.mxu0 0
    %2154 = vmatpush1.bf16.msra.mxu0 0
    %2155 = vmatprep.subr.bf16.mxu0 0
    %2156 = vmatpush1.bf16.msra.mxu0 0
    %2157 = vmatprep.subr.bf16.mxu0 0
    %2158 = vmatpush1.bf16.msra.mxu0 0
    %2159 = vmatprep.subr.bf16.mxu0 0
    %2160 = vmatpush1.bf16.msra.mxu0 0
    %2161 = vmatprep.subr.bf16.mxu0 0
    %2162 = vmatpush1.bf16.msra.mxu0 0
    %2163 = vmatprep.subr.bf16.mxu0 0
    %2164 = vmatpush1.bf16.msra.mxu0 0
    %2165 = vmatprep.subr.bf16.mxu0 0
    %2166 = vmatpush1.bf16.msra.mxu0 0
    %2167 = vmatprep.mubr.bf16.mxu0 0
    %2168 = vmatmul.mubr.bf16.gmra.mrb[0].mxu0 %v2063
    %v2169 = vpop.f32.mrb[0].mxu0
    %v2170 = vadd.f32 0.0, %v2169
    %v2171 = vpop.f32.mrb[0].mxu0
    %v2172 = vpop.f32.mrb[0].mxu0
    %v2173 = vadd.f32 0.0, %v2172
    %v2174 = vpop.f32.mrb[0].mxu0
    %2175 = vmatprep.mubr.bf16.mxu0 0
    %2176 = vmatmul.mubr.bf16.gmra.mrb[0].mxu0 %v2064
    %v2177 = vpop.f32.mrb[0].mxu0
    %v2178 = vadd.f32 0.0, %v2177
    %v2179 = vpop.f32.mrb[0].mxu0
    %v2180 = vpop.f32.mrb[0].mxu0
    %v2181 = vadd.f32 0.0, %v2180
    %v2182 = vpop.f32.mrb[0].mxu0
    %2183 = vmatprep.mubr.bf16.mxu0 0
    %2184 = vmatmul.mubr.bf16.gmra.mrb[0].mxu0 %v2065
    %v2185 = vpop.f32.mrb[0].mxu0
    %v2186 = vadd.f32 0.0, %v2185
    %v2187 = vpop.f32.mrb[0].mxu0
    %v2188 = vpop.f32.mrb[0].mxu0
    %v2189 = vadd.f32 0.0, %v2188
    %v2190 = vpop.f32.mrb[0].mxu0
    %2191 = vmatprep.mubr.bf16.mxu0 0
    %2192 = vmatmul.mubr.bf16.gmra.mrb[0].mxu0 %v2066
    %v2193 = vpop.f32.mrb[0].mxu0
    %v2194 = vadd.f32 0.0, %v2193
    %v2195 = vpop.f32.mrb[0].mxu0
    %v2196 = vpop.f32.mrb[0].mxu0
    %v2197 = vadd.f32 0.0, %v2196
    %v2198 = vpop.f32.mrb[0].mxu0
    %2199 = vmatprep.mubr.bf16.mxu0 0
    %2200 = vmatmul.mubr.bf16.gmra.mrb[0].mxu0 %v2067
    %v2201 = vpop.f32.mrb[0].mxu0
    %v2202 = vadd.f32 0.0, %v2201
    %v2203 = vpop.f32.mrb[0].mxu0
    %v2204 = vpop.f32.mrb[0].mxu0
    %v2205 = vadd.f32 0.0, %v2204
    %v2206 = vpop.f32.mrb[0].mxu0
    %2207 = vmatprep.mubr.bf16.mxu0 0
    %2208 = vmatmul.mubr.bf16.gmra.mrb[0].mxu0 %v2068
    %v2209 = vpop.f32.mrb[0].mxu0
    %v2210 = vadd.f32 0.0, %v2209
    %v2211 = vpop.f32.mrb[0].mxu0
    %v2212 = vpop.f32.mrb[0].mxu0
    %v2213 = vadd.f32 0.0, %v2212
    %v2214 = vpop.f32.mrb[0].mxu0
    %2215 = vmatprep.mubr.bf16.mxu0 0
    %2216 = vmatmul.mubr.bf16.gmra.mrb[0].mxu0 %v2069
    %v2217 = vpop.f32.mrb[0].mxu0
    %v2218 = vadd.f32 0.0, %v2217
    %v2219 = vpop.f32.mrb[0].mxu0
    %v2220 = vpop.f32.mrb[0].mxu0
    %v2221 = vadd.f32 0.0, %v2220
    %v2222 = vpop.f32.mrb[0].mxu0
    %2223 = vmatprep.mubr.bf16.mxu0 0
    %2224 = vmatmul.mubr.bf16.gmra.mrb[0].mxu0 %v2070
    %v2225 = vpop.f32.mrb[0].mxu0
    %v2226 = vadd.f32 0.0, %v2225
    %v2227 = vpop.f32.mrb[0].mxu0
    %v2228 = vpop.f32.mrb[0].mxu0
    %v2229 = vadd.f32 0.0, %v2228
    %v2230 = vpop.f32.mrb[0].mxu0
    %2231 = vdwg.mxu0
    %v2232 = vmul.f32 %v417, %v2170
    %v2233 = vmul.f32 %v422, %v2173
    %v2234 = vmul.f32 %v427, %v2178
    %v2235 = vmul.f32 %v432, %v2181
    %v2236 = vmul.f32 %v437, %v2186
    %v2237 = vmul.f32 %v442, %v2189
    %v2238 = vmul.f32 %v447, %v2194
    %v2239 = vmul.f32 %v452, %v2197
    %v2240 = vmul.f32 %v457, %v2202
    %v2241 = vmul.f32 %v462, %v2205
    %v2242 = vmul.f32 %v467, %v2210
    %v2243 = vmul.f32 %v472, %v2213
    %v2244 = vmul.f32 %v477, %v2218
    %v2245 = vmul.f32 %v482, %v2221
    %v2246 = vmul.f32 %v487, %v2226
    %v2247 = vmul.f32 %v492, %v2229
    %v2248 = vpack.c.bf16 %v2233, %v2232
    %v2249 = vpack.c.bf16 %v2235, %v2234
    %v2250 = vpack.c.bf16 %v2237, %v2236
    %v2251 = vpack.c.bf16 %v2239, %v2238
    %v2252 = vpack.c.bf16 %v2241, %v2240
    %v2253 = vpack.c.bf16 %v2243, %v2242
    %v2254 = vpack.c.bf16 %v2245, %v2244
    %v2255 = vpack.c.bf16 %v2247, %v2246
    %2256 = vmatprep.subr.bf16.mxu0 0
    %2257 = vmatpush1.bf16.msra.mxu0 %v2248
    %2258 = vmatprep.subr.bf16.mxu0 0
    %2259 = vmatpush1.bf16.msra.mxu0 %v2249
    %2260 = vmatprep.subr.bf16.mxu0 0
    %2261 = vmatpush1.bf16.msra.mxu0 %v2250
    %2262 = vmatprep.subr.bf16.mxu0 0
    %2263 = vmatpush1.bf16.msra.mxu0 %v2251
    %2264 = vmatprep.subr.bf16.mxu0 0
    %2265 = vmatpush1.bf16.msra.mxu0 %v2252
    %2266 = vmatprep.subr.bf16.mxu0 0
    %2267 = vmatpush1.bf16.msra.mxu0 %v2253
    %2268 = vmatprep.subr.bf16.mxu0 0
    %2269 = vmatpush1.bf16.msra.mxu0 %v2254
    %2270 = vmatprep.subr.bf16.mxu0 0
    %2271 = vmatpush1.bf16.msra.mxu0 %v2255
    %2272 = vmatprep.subr.bf16.mxu0 0
    %2273 = vmatpush1.bf16.msra.mxu0 0
    %2274 = vmatprep.subr.bf16.mxu0 0
    %2275 = vmatpush1.bf16.msra.mxu0 0
    %2276 = vmatprep.subr.bf16.mxu0 0
    %2277 = vmatpush1.bf16.msra.mxu0 0
    %2278 = vmatprep.subr.bf16.mxu0 0
    %2279 = vmatpush1.bf16.msra.mxu0 0
    %2280 = vmatprep.subr.bf16.mxu0 0
    %2281 = vmatpush1.bf16.msra.mxu0 0
    %2282 = vmatprep.subr.bf16.mxu0 0
    %2283 = vmatpush1.bf16.msra.mxu0 0
    %2284 = vmatprep.subr.bf16.mxu0 0
    %2285 = vmatpush1.bf16.msra.mxu0 0
    %2286 = vmatprep.subr.bf16.mxu0 0
    %2287 = vmatpush1.bf16.msra.mxu0 0
    %2288 = vmatprep.mubr.bf16.mxu0 0
    %2289 = vmatmul.mubr.bf16.gmra.mrb[0].mxu0 %v550
    %v2290 = vpop.f32.mrb[0].mxu0
    %v2291 = vadd.f32 0.0, %v2290
    %v2292 = vpop.f32.mrb[0].mxu0
    %v2293 = vpop.f32.mrb[0].mxu0
    %v2294 = vadd.f32 0.0, %v2293
    %v2295 = vpop.f32.mrb[0].mxu0
    %2296 = vmatprep.mubr.bf16.mxu0 0
    %2297 = vmatmul.mubr.bf16.gmra.mrb[0].mxu0 %v551
    %v2298 = vpop.f32.mrb[0].mxu0
    %v2299 = vadd.f32 0.0, %v2298
    %v2300 = vpop.f32.mrb[0].mxu0
    %v2301 = vpop.f32.mrb[0].mxu0
    %v2302 = vadd.f32 0.0, %v2301
    %v2303 = vpop.f32.mrb[0].mxu0
    %2304 = vmatprep.mubr.bf16.mxu0 0
    %2305 = vmatmul.mubr.bf16.gmra.mrb[0].mxu0 %v552
    %v2306 = vpop.f32.mrb[0].mxu0
    %v2307 = vadd.f32 0.0, %v2306
    %v2308 = vpop.f32.mrb[0].mxu0
    %v2309 = vpop.f32.mrb[0].mxu0
    %v2310 = vadd.f32 0.0, %v2309
    %v2311 = vpop.f32.mrb[0].mxu0
    %2312 = vmatprep.mubr.bf16.mxu0 0
    %2313 = vmatmul.mubr.bf16.gmra.mrb[0].mxu0 %v553
    %v2314 = vpop.f32.mrb[0].mxu0
    %v2315 = vadd.f32 0.0, %v2314
    %v2316 = vpop.f32.mrb[0].mxu0
    %v2317 = vpop.f32.mrb[0].mxu0
    %v2318 = vadd.f32 0.0, %v2317
    %v2319 = vpop.f32.mrb[0].mxu0
    %2320 = vmatprep.mubr.bf16.mxu0 0
    %2321 = vmatmul.mubr.bf16.gmra.mrb[0].mxu0 %v554
    %v2322 = vpop.f32.mrb[0].mxu0
    %v2323 = vadd.f32 0.0, %v2322
    %v2324 = vpop.f32.mrb[0].mxu0
    %v2325 = vpop.f32.mrb[0].mxu0
    %v2326 = vadd.f32 0.0, %v2325
    %v2327 = vpop.f32.mrb[0].mxu0
    %2328 = vmatprep.mubr.bf16.mxu0 0
    %2329 = vmatmul.mubr.bf16.gmra.mrb[0].mxu0 %v555
    %v2330 = vpop.f32.mrb[0].mxu0
    %v2331 = vadd.f32 0.0, %v2330
    %v2332 = vpop.f32.mrb[0].mxu0
    %v2333 = vpop.f32.mrb[0].mxu0
    %v2334 = vadd.f32 0.0, %v2333
    %v2335 = vpop.f32.mrb[0].mxu0
    %2336 = vmatprep.mubr.bf16.mxu0 0
    %2337 = vmatmul.mubr.bf16.gmra.mrb[0].mxu0 %v556
    %v2338 = vpop.f32.mrb[0].mxu0
    %v2339 = vadd.f32 0.0, %v2338
    %v2340 = vpop.f32.mrb[0].mxu0
    %v2341 = vpop.f32.mrb[0].mxu0
    %v2342 = vadd.f32 0.0, %v2341
    %v2343 = vpop.f32.mrb[0].mxu0
    %2344 = vmatprep.mubr.bf16.mxu0 0
    %2345 = vmatmul.mubr.bf16.gmra.mrb[0].mxu0 %v557
    %v2346 = vpop.f32.mrb[0].mxu0
    %v2347 = vadd.f32 0.0, %v2346
    %v2348 = vpop.f32.mrb[0].mxu0
    %v2349 = vpop.f32.mrb[0].mxu0
    %v2350 = vadd.f32 0.0, %v2349
    %v2351 = vpop.f32.mrb[0].mxu0
    %2352 = vdwg.mxu0
    %v2353 = vmul.f32 %v417, %v2291
    %v2354 = vmul.f32 %v422, %v2294
    %v2355 = vmul.f32 %v427, %v2299
    %v2356 = vmul.f32 %v432, %v2302
    %v2357 = vmul.f32 %v437, %v2307
    %v2358 = vmul.f32 %v442, %v2310
    %v2359 = vmul.f32 %v447, %v2315
    %v2360 = vmul.f32 %v452, %v2318
    %v2361 = vmul.f32 %v457, %v2323
    %v2362 = vmul.f32 %v462, %v2326
    %v2363 = vmul.f32 %v467, %v2331
    %v2364 = vmul.f32 %v472, %v2334
    %v2365 = vmul.f32 %v477, %v2339
    %v2366 = vmul.f32 %v482, %v2342
    %v2367 = vmul.f32 %v487, %v2347
    %v2368 = vmul.f32 %v492, %v2350
    %v2369 = vld [vmem:[#allocation19] sm:$0x1]
    %v2371 = vlaneseq
    %v2372 = vshrl.u32 %v2371, 7
    %v2373 = vsub.s32 0, %v2372
    %v2374 = vrot.slane %v2369, %v2373
    %v2376 = vadd.f32 %v2353, %v2374
    %v2377 = vadd.f32 %v2354, %v2374
    %v2378 = vadd.f32 %v2355, %v2374
    %v2379 = vadd.f32 %v2356, %v2374
    %v2380 = vadd.f32 %v2357, %v2374
    %v2381 = vadd.f32 %v2358, %v2374
    %v2382 = vadd.f32 %v2359, %v2374
    %v2383 = vadd.f32 %v2360, %v2374
    %v2384 = vadd.f32 %v2361, %v2374
    %v2385 = vadd.f32 %v2362, %v2374
    %v2386 = vadd.f32 %v2363, %v2374
    %v2387 = vadd.f32 %v2364, %v2374
    %v2388 = vadd.f32 %v2365, %v2374
    %v2389 = vadd.f32 %v2366, %v2374
    %v2390 = vadd.f32 %v2367, %v2374
    %v2391 = vadd.f32 %v2368, %v2374
    %v2392 = vlaneseq
    %v2393 = vand.u32 %v2392, 127
    %vm2394 = vcmp.lt.s32.totalorder %v2393, 8
    %v2395 = vsel %vm2394, %v2376, -1e+30
    %v2396 = vsel %vm2394, %v2377, -1e+30
    %v2397 = vsel %vm2394, %v2378, -1e+30
    %v2398 = vsel %vm2394, %v2379, -1e+30
    %v2399 = vsel %vm2394, %v2380, -1e+30
    %v2400 = vsel %vm2394, %v2381, -1e+30
    %v2401 = vsel %vm2394, %v2382, -1e+30
    %v2402 = vsel %vm2394, %v2383, -1e+30
    %v2403 = vsel %vm2394, %v2384, -1e+30
    %v2404 = vsel %vm2394, %v2385, -1e+30
    %v2405 = vsel %vm2394, %v2386, -1e+30
    %v2406 = vsel %vm2394, %v2387, -1e+30
    %v2407 = vsel %vm2394, %v2388, -1e+30
    %v2408 = vsel %vm2394, %v2389, -1e+30
    %v2409 = vsel %vm2394, %v2390, -1e+30
    %v2410 = vsel %vm2394, %v2391, -1e+30
    %2411 = vmax.xlane.f32.xlu0 %v2395
    %v2412 = vpop.xlane.xlu0 %2411
    %2413 = vmax.xlane.f32.xlu0 %v2396
    %v2414 = vpop.xlane.xlu0 %2413
    %2415 = vmax.xlane.f32.xlu0 %v2397
    %v2416 = vpop.xlane.xlu0 %2415
    %2417 = vmax.xlane.f32.xlu0 %v2398
    %v2418 = vpop.xlane.xlu0 %2417
    %2419 = vmax.xlane.f32.xlu0 %v2399
    %v2420 = vpop.xlane.xlu0 %2419
    %2421 = vmax.xlane.f32.xlu0 %v2400
    %v2422 = vpop.xlane.xlu0 %2421
    %2423 = vmax.xlane.f32.xlu0 %v2401
    %v2424 = vpop.xlane.xlu0 %2423
    %2425 = vmax.xlane.f32.xlu0 %v2402
    %v2426 = vpop.xlane.xlu0 %2425
    %2427 = vmax.xlane.f32.xlu0 %v2403
    %v2428 = vpop.xlane.xlu0 %2427
    %2429 = vmax.xlane.f32.xlu0 %v2404
    %v2430 = vpop.xlane.xlu0 %2429
    %2431 = vmax.xlane.f32.xlu0 %v2405
    %v2432 = vpop.xlane.xlu0 %2431
    %2433 = vmax.xlane.f32.xlu0 %v2406
    %v2434 = vpop.xlane.xlu0 %2433
    %2435 = vmax.xlane.f32.xlu0 %v2407
    %v2436 = vpop.xlane.xlu0 %2435
    %2437 = vmax.xlane.f32.xlu0 %v2408
    %v2438 = vpop.xlane.xlu0 %2437
    %2439 = vmax.xlane.f32.xlu0 %v2409
    %v2440 = vpop.xlane.xlu0 %2439
    %2441 = vmax.xlane.f32.xlu0 %v2410
    %v2442 = vpop.xlane.xlu0 %2441
    %v2443 = vsub.f32 %v2395, %v2412
    %v2444 = vsub.f32 %v2396, %v2414
    %v2445 = vsub.f32 %v2397, %v2416
    %v2446 = vsub.f32 %v2398, %v2418
    %v2447 = vsub.f32 %v2399, %v2420
    %v2448 = vsub.f32 %v2400, %v2422
    %v2449 = vsub.f32 %v2401, %v2424
    %v2450 = vsub.f32 %v2402, %v2426
    %v2451 = vsub.f32 %v2403, %v2428
    %v2452 = vsub.f32 %v2404, %v2430
    %v2453 = vsub.f32 %v2405, %v2432
    %v2454 = vsub.f32 %v2406, %v2434
    %v2455 = vsub.f32 %v2407, %v2436
    %v2456 = vsub.f32 %v2408, %v2438
    %v2457 = vsub.f32 %v2409, %v2440
    %v2458 = vsub.f32 %v2410, %v2442
    %v2459 = vmul.f32 %v2443, 1.442695
    %v2460 = vpow.pop %v2459
    %v2461 = vmul.f32 %v2444, 1.442695
    %v2462 = vpow.pop %v2461
    %v2463 = vmul.f32 %v2445, 1.442695
    %v2464 = vpow.pop %v2463
    %v2465 = vmul.f32 %v2446, 1.442695
    %v2466 = vpow.pop %v2465
    %v2467 = vmul.f32 %v2447, 1.442695
    %v2468 = vpow.pop %v2467
    %v2469 = vmul.f32 %v2448, 1.442695
    %v2470 = vpow.pop %v2469
    %v2471 = vmul.f32 %v2449, 1.442695
    %v2472 = vpow.pop %v2471
    %v2473 = vmul.f32 %v2450, 1.442695
    %v2474 = vpow.pop %v2473
    %v2475 = vmul.f32 %v2451, 1.442695
    %v2476 = vpow.pop %v2475
    %v2477 = vmul.f32 %v2452, 1.442695
    %v2478 = vpow.pop %v2477
    %v2479 = vmul.f32 %v2453, 1.442695
    %v2480 = vpow.pop %v2479
    %v2481 = vmul.f32 %v2454, 1.442695
    %v2482 = vpow.pop %v2481
    %v2483 = vmul.f32 %v2455, 1.442695
    %v2484 = vpow.pop %v2483
    %v2485 = vmul.f32 %v2456, 1.442695
    %v2486 = vpow.pop %v2485
    %v2487 = vmul.f32 %v2457, 1.442695
    %v2488 = vpow.pop %v2487
    %v2489 = vmul.f32 %v2458, 1.442695
    %v2490 = vpow.pop %v2489
    %v2491 = vsel %vm2394, %v2460, 0.0
    %v2492 = vsel %vm2394, %v2462, 0.0
    %v2493 = vsel %vm2394, %v2464, 0.0
    %v2494 = vsel %vm2394, %v2466, 0.0
    %v2495 = vsel %vm2394, %v2468, 0.0
    %v2496 = vsel %vm2394, %v2470, 0.0
    %v2497 = vsel %vm2394, %v2472, 0.0
    %v2498 = vsel %vm2394, %v2474, 0.0
    %v2499 = vsel %vm2394, %v2476, 0.0
    %v2500 = vsel %vm2394, %v2478, 0.0
    %v2501 = vsel %vm2394, %v2480, 0.0
    %v2502 = vsel %vm2394, %v2482, 0.0
    %v2503 = vsel %vm2394, %v2484, 0.0
    %v2504 = vsel %vm2394, %v2486, 0.0
    %v2505 = vsel %vm2394, %v2488, 0.0
    %v2506 = vsel %vm2394, %v2490, 0.0
    %2507 = vadd.xlane.f32.xlu0 %v2491
    %v2508 = vpop.xlane.xlu0 %2507
    %2509 = vadd.xlane.f32.xlu0 %v2492
    %v2510 = vpop.xlane.xlu0 %2509
    %2511 = vadd.xlane.f32.xlu0 %v2493
    %v2512 = vpop.xlane.xlu0 %2511
    %2513 = vadd.xlane.f32.xlu0 %v2494
    %v2514 = vpop.xlane.xlu0 %2513
    %2515 = vadd.xlane.f32.xlu0 %v2495
    %v2516 = vpop.xlane.xlu0 %2515
    %2517 = vadd.xlane.f32.xlu0 %v2496
    %v2518 = vpop.xlane.xlu0 %2517
    %2519 = vadd.xlane.f32.xlu0 %v2497
    %v2520 = vpop.xlane.xlu0 %2519
    %2521 = vadd.xlane.f32.xlu0 %v2498
    %v2522 = vpop.xlane.xlu0 %2521
    %2523 = vadd.xlane.f32.xlu0 %v2499
    %v2524 = vpop.xlane.xlu0 %2523
    %2525 = vadd.xlane.f32.xlu0 %v2500
    %v2526 = vpop.xlane.xlu0 %2525
    %2527 = vadd.xlane.f32.xlu0 %v2501
    %v2528 = vpop.xlane.xlu0 %2527
    %2529 = vadd.xlane.f32.xlu0 %v2502
    %v2530 = vpop.xlane.xlu0 %2529
    %2531 = vadd.xlane.f32.xlu0 %v2503
    %v2532 = vpop.xlane.xlu0 %2531
    %2533 = vadd.xlane.f32.xlu0 %v2504
    %v2534 = vpop.xlane.xlu0 %2533
    %2535 = vadd.xlane.f32.xlu0 %v2505
    %v2536 = vpop.xlane.xlu0 %2535
    %2537 = vadd.xlane.f32.xlu0 %v2506
    %v2538 = vpop.xlane.xlu0 %2537
    %v2539 = vlog2.pop %v2508
    %v2540 = vmul.f32 %v2539, 0.6931472
    %v2541 = vlog2.pop %v2510
    %v2542 = vmul.f32 %v2541, 0.6931472
    %v2543 = vlog2.pop %v2512
    %v2544 = vmul.f32 %v2543, 0.6931472
    %v2545 = vlog2.pop %v2514
    %v2546 = vmul.f32 %v2545, 0.6931472
    %v2547 = vlog2.pop %v2516
    %v2548 = vmul.f32 %v2547, 0.6931472
    %v2549 = vlog2.pop %v2518
    %v2550 = vmul.f32 %v2549, 0.6931472
    %v2551 = vlog2.pop %v2520
    %v2552 = vmul.f32 %v2551, 0.6931472
    %v2553 = vlog2.pop %v2522
    %v2554 = vmul.f32 %v2553, 0.6931472
    %v2555 = vlog2.pop %v2524
    %v2556 = vmul.f32 %v2555, 0.6931472
    %v2557 = vlog2.pop %v2526
    %v2558 = vmul.f32 %v2557, 0.6931472
    %v2559 = vlog2.pop %v2528
    %v2560 = vmul.f32 %v2559, 0.6931472
    %v2561 = vlog2.pop %v2530
    %v2562 = vmul.f32 %v2561, 0.6931472
    %v2563 = vlog2.pop %v2532
    %v2564 = vmul.f32 %v2563, 0.6931472
    %v2565 = vlog2.pop %v2534
    %v2566 = vmul.f32 %v2565, 0.6931472
    %v2567 = vlog2.pop %v2536
    %v2568 = vmul.f32 %v2567, 0.6931472
    %v2569 = vlog2.pop %v2538
    %v2570 = vmul.f32 %v2569, 0.6931472
    %v2571 = vsub.f32 %v2443, %v2540
    %v2572 = vsub.f32 %v2444, %v2542
    %v2573 = vsub.f32 %v2445, %v2544
    %v2574 = vsub.f32 %v2446, %v2546
    %v2575 = vsub.f32 %v2447, %v2548
    %v2576 = vsub.f32 %v2448, %v2550
    %v2577 = vsub.f32 %v2449, %v2552
    %v2578 = vsub.f32 %v2450, %v2554
    %v2579 = vsub.f32 %v2451, %v2556
    %v2580 = vsub.f32 %v2452, %v2558
    %v2581 = vsub.f32 %v2453, %v2560
    %v2582 = vsub.f32 %v2454, %v2562
    %v2583 = vsub.f32 %v2455, %v2564
    %v2584 = vsub.f32 %v2456, %v2566
    %v2585 = vsub.f32 %v2457, %v2568
    %v2586 = vsub.f32 %v2458, %v2570
    %2587 = vst [vmem:[#allocation20] sm:$0xff] %v2571
    %2588 = vst [vmem:[#allocation20 + $0x8] sm:$0xff] %v2572
    %2589 = vst [vmem:[#allocation20 + $0x10] sm:$0xff] %v2573
    %2590 = vst [vmem:[#allocation20 + $0x18] sm:$0xff] %v2574
    %2591 = vst [vmem:[#allocation20 + $0x20] sm:$0xff] %v2575
    %2592 = vst [vmem:[#allocation20 + $0x28] sm:$0xff] %v2576
    %2593 = vst [vmem:[#allocation20 + $0x30] sm:$0xff] %v2577
    %2594 = vst [vmem:[#allocation20 + $0x38] sm:$0xff] %v2578
    %2595 = vst [vmem:[#allocation20 + $0x40] sm:$0xff] %v2579
    %2596 = vst [vmem:[#allocation20 + $0x48] sm:$0xff] %v2580
    %2597 = vst [vmem:[#allocation20 + $0x50] sm:$0xff] %v2581
    %2598 = vst [vmem:[#allocation20 + $0x58] sm:$0xff] %v2582
    %2599 = vst [vmem:[#allocation20 + $0x60] sm:$0xff] %v2583
    %2600 = vst [vmem:[#allocation20 + $0x68] sm:$0xff] %v2584
    %2601 = vst [vmem:[#allocation20 + $0x70] sm:$0xff] %v2585
    %2602 = vst [vmem:[#allocation20 + $0x78] sm:$0xff] %v2586
    // Predicated region
    $region90: #{gcn_net_forward.1} parent=1 // pred_check
      _
    $region91: #{gcn_net_forward.1} parent=1 // pred_check_branch
      %2604 = sbr.rel (0) target = $region93
    $region92: #{gcn_net_forward.1} parent=1 // pred_region
      %s2606 = ssub.s32 2048, 2048
      %2607 = vsyncadd [#allocation4], %s2606
      %s2608 = sshll.u32 [#allocation20], 4
      %s2609 = int_to_ptr.vmem [resolvable:$true] %s2608
      %2614 = dma.vmem_to_hbm [thread:$0]  %s2609, 2048, %s11, [#allocation4], 128, 128, 8
    $region93: #{gcn_net_forward.1} parent=1 // pred_fallthru
      _
    // Predicated region
    $region94: #{gcn_net_forward.1} parent=1 // pred_check
      _
    $region95: #{gcn_net_forward.1} parent=1 // pred_check_branch
      %2616 = sbr.rel (0) target = $region97
    $region96: #{gcn_net_forward.1} parent=1 // pred_region
      %2617 = dma.done [#allocation4], 2048
    $region97: #{gcn_net_forward.1} parent=1 // pred_fallthru
      _
    %2618 = vsyncpa [#allocation3], 1
    %2619 = vsyncpa [#allocation6], 1
    %2620 = vsyncpa [#allocation9], 1
    %2621 = vsyncpa [#allocation12], 1
    %2622 = vsyncpa [#allocation15], 1
    %2623 = vsyncpa [#allocation18], 1
    %2624 = vsyncpa [#allocation4], 1

</llo_original>
